<compile_context>
chip_gen: v6e
topology: v6e:2x2x1
jax: 0.10.0
libtpu: 0.0.40
codegen_flags: <defaults>
</compile_context>

<pallas_src>
import jax
import jax.numpy as jnp
from jax.experimental import pallas as pl
from jax.experimental.pallas import tpu as pltpu


def _ceil_to(a, b):
    return (a + b - 1) // b * b


def _make_gin_kernel(L, T, node_tile, n_real, n_pad, dp):
    mask_needed = (n_pad != n_real)

    def kernel(x_hbm, adj_ref, pool_ref, w1_ref, w2_ref, bnb_ref,
               cat_ref,
               h_ref, hnew_ref, sum_ref, sumsq_ref, pacc_ref, cnt_ref):
        l = pl.program_id(0)   # layer index
        t = pl.program_id(1)   # node-tile index

        # ---- one-time init: DMA padded node features into resident VMEM buffer ----
        @pl.when((l == 0) & (t == 0))
        def _load_x():
            pltpu.sync_copy(x_hbm, h_ref)

        # ---- per-layer init: zero BN / pooling accumulators ------------------------
        @pl.when(t == 0)
        def _zero():
            sum_ref[...] = jnp.zeros_like(sum_ref)
            sumsq_ref[...] = jnp.zeros_like(sumsq_ref)
            pacc_ref[...] = jnp.zeros_like(pacc_ref)
            cnt_ref[...] = jnp.zeros_like(cnt_ref)

        bnb = bnb_ref[0]                       # (4, dp): rows = b1, b2, gamma, beta

        # ---- node tile: GIN aggregation (self-loops folded into adj) + MLP ---------
        # adj is stored bf16 in HBM (small integer counts -> exact); upcast so all
        # matmul accumulation stays f32.  (Casting h to bf16 would also enable the
        # native bf16 MXU path at a small accuracy cost.)
        adj = adj_ref[...].astype(jnp.float32)                      # (tile, n_pad)
        agg = jnp.dot(adj, h_ref[...], preferred_element_type=jnp.float32)
        z = jnp.dot(agg, w1_ref[0], preferred_element_type=jnp.float32) + bnb[0:1]
        z = jnp.maximum(z, 0.0)
        z = jnp.dot(z, w2_ref[0], preferred_element_type=jnp.float32) + bnb[1:2]
        hn = jnp.maximum(z, 0.0)                                    # (tile, dp)

        if mask_needed:   # padded rows must not pollute BN stats / pooling
            rows = (jax.lax.broadcasted_iota(jnp.int32, (node_tile, dp), 0)
                    + t * node_tile)
            hn = jnp.where(rows < n_real, hn, 0.0)

        off = pl.multiple_of(t * node_tile, node_tile)
        hnew_ref[pl.ds(off, node_tile), :] = hn

        # BN statistics + streamed global_add_pool (pre-BN), overlapped per tile.
        sum_ref[...] += jnp.sum(hn, axis=0, keepdims=True)
        sumsq_ref[...] += jnp.sum(hn * hn, axis=0, keepdims=True)
        pacc_ref[...] += jnp.dot(pool_ref[...], hn,
                                 preferred_element_type=jnp.float32)
        cnt_ref[...] += jnp.sum(pool_ref[...], axis=1, keepdims=True)

        # ---- layer finalize: BN affine (tile-by-tile) + pooled fixup ---------------
        @pl.when(t == T - 1)
        def _finalize():
            inv_n = 1.0 / float(n_real)
            mean = sum_ref[...] * inv_n
            var = jnp.maximum(sumsq_ref[...] * inv_n - mean * mean, 0.0)
            inv_std = jax.lax.rsqrt(var + 1e-5)
            scale = inv_std * bnb[2:3]          # (1, dp)
            shift = bnb[3:4] - mean * scale     # (1, dp)

            def bn_tile(i, carry):
                o = pl.multiple_of(i * node_tile, node_tile)
                h_ref[pl.ds(o, node_tile), :] = (
                    hnew_ref[pl.ds(o, node_tile), :] * scale + shift)
                return carry
            jax.lax.fori_loop(0, T, bn_tile, 0)

            # sum_i (hn_i * scale + shift) = pooled_pre * scale + count * shift
            cat_ref[0] = pacc_ref[...] * scale + cnt_ref[...] * shift

    return kernel


def _proj_head_kernel(cat_ref, p1_ref, p2_ref, pb_ref, y_ref, emb_ref):
    """proj_head (Linear -> ReLU -> Linear) + L2 normalization of y and cat."""
    cat = cat_ref[...]                                              # (G, L*dp)
    y1 = jnp.dot(cat, p1_ref[...], preferred_element_type=jnp.float32) + pb_ref[0:1]
    y1 = jnp.maximum(y1, 0.0)
    y = jnp.dot(y1, p2_ref[...], preferred_element_type=jnp.float32) + pb_ref[1:2]

    y_sq = jnp.sum(y * y, axis=1, keepdims=True)
    y_ref[...] = y * jax.lax.rsqrt(jnp.maximum(y_sq, 1e-24))
    c_sq = jnp.sum(cat * cat, axis=1, keepdims=True)
    emb_ref[...] = cat * jax.lax.rsqrt(jnp.maximum(c_sq, 1e-24))


def encoder_core_forward(x, edge_index, batch, params, num_gc_layers, dim,
                         num_graphs, node_tile=128):
    """Builds dense (A+I)/pooling matrices, packs/pads params, calls the kernels."""
    N, F = x.shape
    L = num_gc_layers
    G = num_graphs

    dp = max(_ceil_to(F, 128), _ceil_to(dim, 128))   # lane-dense feature width
    cat_dim = L * dim
    cat_pad = _ceil_to(cat_dim, 128)
    n_pad = _ceil_to(N, node_tile)
    T = n_pad // node_tile

    # Dense adjacency with self-loops folded in for REAL nodes only; padded rows /
    # columns stay zero so padded nodes never feed the aggregation.  Stored bf16.
    src, dst = edge_index[0], edge_index[1]
    adj = jnp.zeros((n_pad, n_pad), jnp.float32).at[dst, src].add(1.0)
    adj = adj.at[jnp.arange(N), jnp.arange(N)].add(1.0)
    adj = adj.astype(jnp.bfloat16)

    # Pooling one-hot; padded nodes get graph id -1 -> all-zero columns.
    batch_pad = jnp.concatenate(
        [batch.astype(jnp.int32), -jnp.ones((n_pad - N,), jnp.int32)])
    pool = (batch_pad[None, :] == jnp.arange(G)[:, None]).astype(jnp.float32)

    x_pad = jnp.zeros((n_pad, dp), jnp.float32).at[:N, :F].set(x.astype(jnp.float32))

    # Packed / lane-padded per-layer parameters (pads are exact: gamma/beta pads are
    # zero, so padded feature lanes stay identically zero through linear/ReLU/BN).
    W1s = jnp.zeros((L, dp, dp), jnp.float32)
    W2s = jnp.zeros((L, dp, dp), jnp.float32)
    BNB = jnp.zeros((L, 4, dp), jnp.float32)
    for i in range(L):
        lp = params["layers"][i]
        in_d = lp["w1"].shape[0]
        W1s = W1s.at[i, :in_d, :dim].set(lp["w1"])
        W2s = W2s.at[i, :dim, :dim].set(lp["w2"])
        BNB = BNB.at[i, 0, :dim].set(lp["b1"].reshape(-1))
        BNB = BNB.at[i, 1, :dim].set(lp["b2"].reshape(-1))
        BNB = BNB.at[i, 2, :dim].set(lp["gamma"].reshape(-1))
        BNB = BNB.at[i, 3, :dim].set(lp["beta"].reshape(-1))

    # ------------------- main GIN kernel: grid = (layers, node-tiles) --------------
    kernel = _make_gin_kernel(L, T, node_tile, N, n_pad, dp)

    in_specs = [
        pl.BlockSpec(memory_space=pl.ANY),                        # x (DMA'd once)
        pl.BlockSpec((node_tile, n_pad), lambda l, t: (t, 0)),    # adj row tile (bf16)
        pl.BlockSpec((G, node_tile), lambda l, t: (0, t)),        # pooling columns
        pl.BlockSpec((1, dp, dp), lambda l, t: (l, 0, 0)),        # W1 of layer l
        pl.BlockSpec((1, dp, dp), lambda l, t: (l, 0, 0)),        # W2 of layer l
        pl.BlockSpec((1, 4, dp), lambda l, t: (l, 0, 0)),         # b1/b2/gamma/beta
    ]
    out_specs = pl.BlockSpec((1, G, dp), lambda l, t: (l, 0, 0))  # pooled, per layer
    scratch_shapes = [
        pltpu.VMEM((n_pad, dp), jnp.float32),   # current layer input  (all nodes)
        pltpu.VMEM((n_pad, dp), jnp.float32),   # pre-BN layer output  (all nodes)
        pltpu.VMEM((1, dp), jnp.float32),       # BN sum
        pltpu.VMEM((1, dp), jnp.float32),       # BN sum of squares
        pltpu.VMEM((G, dp), jnp.float32),       # streamed pooled (pre-BN)
        pltpu.VMEM((G, 1), jnp.float32),        # nodes per graph
    ]

    def _b(shape, itemsize=4):
        n = 1
        for s in shape:
            n *= s
        return itemsize * n

    footprint = (
        2 * (_b((node_tile, n_pad), 2) + _b((G, node_tile))
             + 2 * _b((1, dp, dp)) + _b((1, 4, dp)) + _b((1, G, dp)))
        + 2 * _b((n_pad, dp)) + 2 * _b((1, dp)) + _b((G, dp)) + _b((8, 128)))
    try:
        vmem_cap = int(pltpu.get_tpu_info().vmem_capacity_bytes)
    except Exception:
        vmem_cap = 64 * 2**20                   # conservative (v7x per-TC) fallback
    vmem_limit = int(min(int(0.75 * vmem_cap), max(16 * 2**20, 2 * footprint)))

    pooled = pl.pallas_call(
        kernel,
        grid=(L, T),
        out_shape=jax.ShapeDtypeStruct((L, G, dp), jnp.float32),
        in_specs=in_specs,
        out_specs=out_specs,
        scratch_shapes=scratch_shapes,
        compiler_params=pltpu.CompilerParams(
            dimension_semantics=("arbitrary", "arbitrary"),
            vmem_limit_bytes=vmem_limit,
        ),
    )(x_pad, adj, pool, W1s, W2s, BNB)

    # ------------ tiny epilogue kernel: projection head + L2 normalization ---------
    Ldp = L * dp
    P1p = jnp.zeros((L, dp, cat_pad), jnp.float32)
    for i in range(L):
        P1p = P1p.at[i, :dim, :cat_dim].set(params["p1"][i * dim:(i + 1) * dim, :])
    P1p = P1p.reshape(Ldp, cat_pad)             # single K = L*dp contraction
    P2p = jnp.zeros((cat_pad, cat_pad), jnp.float32).at[:cat_dim, :cat_dim].set(
        params["p2"])
    PBp = jnp.zeros((2, cat_pad), jnp.float32)
    PBp = PBp.at[0, :cat_dim].set(params["pb1"].reshape(-1))
    PBp = PBp.at[1, :cat_dim].set(params["pb2"].reshape(-1))

    cat2d = jnp.transpose(pooled, (1, 0, 2)).reshape(G, Ldp)

    y_pad, emb_pad = pl.pallas_call(
        _proj_head_kernel,
        out_shape=(jax.ShapeDtypeStruct((G, cat_pad), jnp.float32),
                   jax.ShapeDtypeStruct((G, Ldp), jnp.float32)),
    )(cat2d, P1p, P2p, PBp)

    y = y_pad[:, :cat_dim]
    emb = emb_pad.reshape(G, L, dp)[:, :, :dim].reshape(G, cat_dim)
    return y, emb


def make_params(key, num_features, dim, num_gc_layers):
    """Deterministic synthetic parameters matching Encoder_Core.__init__ shapes."""
    layers = []
    for i in range(num_gc_layers):
        in_dim = num_features if i == 0 else dim
        key, k1, k2, k3, k4 = jax.random.split(key, 5)
        layers.append(
            dict(
                w1=0.1 * jax.random.normal(k1, (in_dim, dim), jnp.float32),
                b1=0.01 * jax.random.normal(k2, (1, dim), jnp.float32),
                w2=0.1 * jax.random.normal(k3, (dim, dim), jnp.float32),
                b2=0.01 * jax.random.normal(k4, (1, dim), jnp.float32),
                gamma=jnp.ones((1, dim), jnp.float32),
                beta=jnp.zeros((1, dim), jnp.float32),
            )
        )
    cat_dim = num_gc_layers * dim
    key, k1, k2, k3, k4 = jax.random.split(key, 5)
    return dict(
        layers=layers,
        p1=0.1 * jax.random.normal(k1, (cat_dim, cat_dim), jnp.float32),
        pb1=0.01 * jax.random.normal(k2, (1, cat_dim), jnp.float32),
        p2=0.1 * jax.random.normal(k3, (cat_dim, cat_dim), jnp.float32),
        pb2=0.01 * jax.random.normal(k4, (1, cat_dim), jnp.float32),
    )


def reference_forward(x, edge_index, batch, params, num_gc_layers, dim, num_graphs):
    """Pure-JAX reference of Encoder_Core.in_forward for correctness check."""
    N = x.shape[0]
    adj = jnp.zeros((N, N), jnp.float32).at[edge_index[1], edge_index[0]].add(1.0)
    pool = (batch[None, :] == jnp.arange(num_graphs)[:, None]).astype(jnp.float32)
    h = x.astype(jnp.float32)
    xs = []
    for i in range(num_gc_layers):
        lp = params["layers"][i]
        agg = adj @ h + h
        z = jnp.maximum(agg @ lp["w1"] + lp["b1"], 0.0) @ lp["w2"] + lp["b2"]
        h = jnp.maximum(z, 0.0)
        mu = jnp.mean(h, axis=0, keepdims=True)
        var = jnp.mean((h - mu) ** 2, axis=0, keepdims=True)
        h = (h - mu) / jnp.sqrt(var + 1e-5) * lp["gamma"] + lp["beta"]
        xs.append(pool @ h)
    cat = jnp.concatenate(xs, axis=1)
    y = jnp.maximum(cat @ params["p1"] + params["pb1"], 0.0) @ params["p2"] + params["pb2"]

    def l2n(a):
        return a / jnp.maximum(jnp.linalg.norm(a, axis=1, keepdims=True), 1e-12)

    return l2n(y), l2n(cat)


if __name__ == "__main__":
    # Small synthetic graph batch consistent with the module's forward.
    N_NODES = 16          # total nodes across graphs (any value; padded internally)
    NUM_FEATURES = 8
    DIM = 32
    NUM_GC_LAYERS = 3
    NUM_GRAPHS = 2
    NUM_EDGES = 40

    key = jax.random.PRNGKey(0)
    key, kx, ke, kp = jax.random.split(key, 4)

    x = jax.random.normal(kx, (N_NODES, NUM_FEATURES), jnp.float32)
    edge_index = jax.random.randint(ke, (2, NUM_EDGES), 0, N_NODES, dtype=jnp.int32)
    batch = jnp.concatenate(
        [jnp.zeros(N_NODES // 2, jnp.int32), jnp.ones(N_NODES - N_NODES // 2, jnp.int32)]
    )
    params = make_params(kp, NUM_FEATURES, DIM, NUM_GC_LAYERS)

    y, emb = encoder_core_forward(
        x, edge_index, batch, params, NUM_GC_LAYERS, DIM, NUM_GRAPHS, node_tile=128
    )
    jax.block_until_ready((y, emb))

    y_ref, emb_ref = reference_forward(
        x, edge_index, batch, params, NUM_GC_LAYERS, DIM, NUM_GRAPHS
    )
    assert y.shape == y_ref.shape and emb.shape == emb_ref.shape
    assert jnp.allclose(y, y_ref, atol=5e-4, rtol=5e-4)
    assert jnp.allclose(emb, emb_ref, atol=5e-4, rtol=5e-4)

    print("KERNEL_OK")
</pallas_src>

<mosaic_0001>
module attributes {stable_mosaic.version = 11 : i64} {
  func.func @kernel(%arg0: i32, %arg1: i32, %arg2: memref<128x128xf32, #tpu.memory_space<any>>, %arg3: memref<128x128xbf16, #tpu.memory_space<vmem>>, %arg4: memref<2x128xf32, #tpu.memory_space<vmem>>, %arg5: memref<1x128x128xf32, #tpu.memory_space<vmem>>, %arg6: memref<1x128x128xf32, #tpu.memory_space<vmem>>, %arg7: memref<1x4x128xf32, #tpu.memory_space<vmem>>, %arg8: memref<1x2x128xf32, #tpu.memory_space<vmem>>, %arg9: memref<128x128xf32, #tpu.memory_space<vmem>>, %arg10: memref<128x128xf32, #tpu.memory_space<vmem>>, %arg11: memref<1x128xf32, #tpu.memory_space<vmem>>, %arg12: memref<1x128xf32, #tpu.memory_space<vmem>>, %arg13: memref<2x128xf32, #tpu.memory_space<vmem>>, %arg14: memref<2x1xf32, #tpu.memory_space<vmem>>) attributes {dimension_semantics = [#tpu.dimension_semantics<arbitrary>, #tpu.dimension_semantics<arbitrary>], iteration_bounds = array<i64: 3, 1>, scalar_prefetch = 0 : i64, scratch_operands = 6 : i64, tpu.core_type = #tpu.core_type<tc>, window_params = [{}, {transform_indices = @transform_1, window_bounds = array<i64: 128, 128>}, {transform_indices = @transform_2, window_bounds = array<i64: 2, 128>}, {transform_indices = @transform_3, window_bounds = array<i64: 1, 128, 128>}, {transform_indices = @transform_4, window_bounds = array<i64: 1, 128, 128>}, {transform_indices = @transform_5, window_bounds = array<i64: 1, 4, 128>}, {transform_indices = @transform_6, window_bounds = array<i64: 1, 2, 128>}]} {
    %c0_i32 = arith.constant 0 : i32
    %0 = arith.cmpi eq, %arg0, %c0_i32 : i32
    %c0_i32_0 = arith.constant 0 : i32
    %1 = arith.cmpi eq, %arg1, %c0_i32_0 : i32
    %2 = arith.andi %0, %1 : i1
    %3 = arith.extui %2 : i1 to i32
    %c0_i32_1 = arith.constant 0 : i32
    %4 = arith.cmpi ne, %3, %c0_i32_1 : i32
    scf.if %4 {
      "tpu.region"() ({
        %67 = tpu.sem_alloc : memref<!tpu.dma_semaphore, #tpu.memory_space<semaphore_mem>>
        tpu.enqueue_dma source(%arg2 : memref<128x128xf32, #tpu.memory_space<any>>) target(%arg9 : memref<128x128xf32, #tpu.memory_space<vmem>>) target_semaphore(%67 : memref<!tpu.dma_semaphore, #tpu.memory_space<semaphore_mem>>)
        tpu.wait_dma2 semaphore(%67 : memref<!tpu.dma_semaphore, #tpu.memory_space<semaphore_mem>>) src(%arg2 : memref<128x128xf32, #tpu.memory_space<any>>) dst(%arg9 : memref<128x128xf32, #tpu.memory_space<vmem>>)
        tpu.yield
      }) : () -> ()
    } else {
    }
    %c0_i32_2 = arith.constant 0 : i32
    %5 = arith.cmpi eq, %arg1, %c0_i32_2 : i32
    %6 = arith.extui %5 : i1 to i32
    %c0_i32_3 = arith.constant 0 : i32
    %7 = arith.cmpi ne, %6, %c0_i32_3 : i32
    scf.if %7 {
      %cst_49 = arith.constant 0.000000e+00 : f32
      %67 = vector.broadcast %cst_49 : f32 to vector<1x128xf32>
      %c0_50 = arith.constant 0 : index
      %c0_51 = arith.constant 0 : index
      %68 = vector.load %arg11[%c0_50, %c0_51] : memref<1x128xf32, #tpu.memory_space<vmem>>, vector<1x128xf32>
      tpu.vector_store %arg11[%c0_50, %c0_51], %67 {strides = array<i32>} : memref<1x128xf32, #tpu.memory_space<vmem>>, vector<1x128xf32>,
      %cst_52 = arith.constant 0.000000e+00 : f32
      %69 = vector.broadcast %cst_52 : f32 to vector<1x128xf32>
      %c0_53 = arith.constant 0 : index
      %c0_54 = arith.constant 0 : index
      %70 = vector.load %arg12[%c0_53, %c0_54] : memref<1x128xf32, #tpu.memory_space<vmem>>, vector<1x128xf32>
      tpu.vector_store %arg12[%c0_53, %c0_54], %69 {strides = array<i32>} : memref<1x128xf32, #tpu.memory_space<vmem>>, vector<1x128xf32>,
      %cst_55 = arith.constant 0.000000e+00 : f32
      %71 = vector.broadcast %cst_55 : f32 to vector<2x128xf32>
      %c0_56 = arith.constant 0 : index
      %c0_57 = arith.constant 0 : index
      %72 = vector.load %arg13[%c0_56, %c0_57] : memref<2x128xf32, #tpu.memory_space<vmem>>, vector<2x128xf32>
      tpu.vector_store %arg13[%c0_56, %c0_57], %71 {strides = array<i32>} : memref<2x128xf32, #tpu.memory_space<vmem>>, vector<2x128xf32>,
      %cst_58 = arith.constant 0.000000e+00 : f32
      %73 = vector.broadcast %cst_58 : f32 to vector<2x1xf32>
      %c0_59 = arith.constant 0 : index
      %c0_60 = arith.constant 0 : index
      %74 = vector.load %arg14[%c0_59, %c0_60] : memref<2x1xf32, #tpu.memory_space<vmem>>, vector<2x1xf32>
      tpu.vector_store %arg14[%c0_59, %c0_60], %73 {strides = array<i32>} : memref<2x1xf32, #tpu.memory_space<vmem>>, vector<2x1xf32>,
    } else {
    }
    %c0 = arith.constant 0 : index
    %c0_4 = arith.constant 0 : index
    %c0_5 = arith.constant 0 : index
    %8 = vector.load %arg7[%c0, %c0_4, %c0_5] : memref<1x4x128xf32, #tpu.memory_space<vmem>>, vector<1x4x128xf32>
    %9 = vector.shape_cast %8 : vector<1x4x128xf32> to vector<4x128xf32>
    %c0_6 = arith.constant 0 : index
    %c0_7 = arith.constant 0 : index
    %10 = vector.load %arg3[%c0_6, %c0_7] : memref<128x128xbf16, #tpu.memory_space<vmem>>, vector<128x128xbf16>
    %11 = arith.extf %10 : vector<128x128xbf16> to vector<128x128xf32>
    %c0_8 = arith.constant 0 : index
    %c0_9 = arith.constant 0 : index
    %12 = vector.load %arg9[%c0_8, %c0_9] : memref<128x128xf32, #tpu.memory_space<vmem>>, vector<128x128xf32>
    %cst = arith.constant dense<0.000000e+00> : vector<128x128xf32>
    %13 = tpu.matmul %11, %12, %cst {dimension_numbers = #tpu.dot_dimension_numbers<[1], [0], [0], [1], [0, 0, 1, 1], [], []>} : vector<128x128xf32>, vector<128x128xf32>, vector<128x128xf32> -> vector<128x128xf32>
    %c0_10 = arith.constant 0 : index
    %c0_11 = arith.constant 0 : index
    %c0_12 = arith.constant 0 : index
    %14 = vector.load %arg5[%c0_10, %c0_11, %c0_12] : memref<1x128x128xf32, #tpu.memory_space<vmem>>, vector<1x128x128xf32>
    %15 = vector.shape_cast %14 : vector<1x128x128xf32> to vector<128x128xf32>
    %cst_13 = arith.constant dense<0.000000e+00> : vector<128x128xf32>
    %16 = tpu.matmul %13, %15, %cst_13 {dimension_numbers = #tpu.dot_dimension_numbers<[1], [0], [0], [1], [0, 0, 1, 1], [], []>} : vector<128x128xf32>, vector<128x128xf32>, vector<128x128xf32> -> vector<128x128xf32>
    %17 = vector.extract_strided_slice %9 {offsets = [0, 0], sizes = [1, 128], strides = [1, 1]} : vector<4x128xf32> to vector<1x128xf32>
    %18 = vector.broadcast %17 : vector<1x128xf32> to vector<128x128xf32>
    %19 = arith.addf %16, %18 : vector<128x128xf32>
    %cst_14 = arith.constant 0.000000e+00 : f32
    %20 = vector.broadcast %cst_14 : f32 to vector<128x128xf32>
    %21 = arith.maximumf %19, %20 : vector<128x128xf32>
    %c0_15 = arith.constant 0 : index
    %c0_16 = arith.constant 0 : index
    %c0_17 = arith.constant 0 : index
    %22 = vector.load %arg6[%c0_15, %c0_16, %c0_17] : memref<1x128x128xf32, #tpu.memory_space<vmem>>, vector<1x128x128xf32>
    %23 = vector.shape_cast %22 : vector<1x128x128xf32> to vector<128x128xf32>
    %cst_18 = arith.constant dense<0.000000e+00> : vector<128x128xf32>
    %24 = tpu.matmul %21, %23, %cst_18 {dimension_numbers = #tpu.dot_dimension_numbers<[1], [0], [0], [1], [0, 0, 1, 1], [], []>} : vector<128x128xf32>, vector<128x128xf32>, vector<128x128xf32> -> vector<128x128xf32>
    %25 = vector.extract_strided_slice %9 {offsets = [1, 0], sizes = [1, 128], strides = [1, 1]} : vector<4x128xf32> to vector<1x128xf32>
    %26 = vector.broadcast %25 : vector<1x128xf32> to vector<128x128xf32>
    %27 = arith.addf %24, %26 : vector<128x128xf32>
    %cst_19 = arith.constant 0.000000e+00 : f32
    %28 = vector.broadcast %cst_19 : f32 to vector<128x128xf32>
    %29 = arith.maximumf %27, %28 : vector<128x128xf32>
    %30 = tpu.iota {dimensions = array<i32: 0>} : vector<128x128xi32>
    %c128_i32 = arith.constant 128 : i32
    %31 = arith.muli %arg1, %c128_i32 : i32
    %32 = vector.broadcast %31 : i32 to vector<128x128xi32>
    %33 = arith.addi %30, %32 : vector<128x128xi32>
    %c16_i32 = arith.constant 16 : i32
    %34 = vector.broadcast %c16_i32 : i32 to vector<128x128xi32>
    %35 = arith.cmpi slt, %33, %34 : vector<128x128xi32>
    %cst_20 = arith.constant 0.000000e+00 : f32
    %36 = vector.broadcast %cst_20 : f32 to vector<128x128xf32>
    %37 = arith.select %35, %29, %36 : vector<128x128xi1>, vector<128x128xf32>
    %c128_i32_21 = arith.constant 128 : i32
    %38 = arith.muli %arg1, %c128_i32_21 : i32
    %39 = tpu.assume_multiple %38, 128 : i32
    %40 = arith.index_cast %39 : i32 to index
    %c0_22 = arith.constant 0 : index
    %41 = vector.load %arg10[%40, %c0_22] : memref<128x128xf32, #tpu.memory_space<vmem>>, vector<128x128xf32>
    tpu.vector_store %arg10[%40, %c0_22], %37 {strides = array<i32>} : memref<128x128xf32, #tpu.memory_space<vmem>>, vector<128x128xf32>,
    %c0_23 = arith.constant 0 : index
    %c0_24 = arith.constant 0 : index
    %42 = vector.load %arg11[%c0_23, %c0_24] : memref<1x128xf32, #tpu.memory_space<vmem>>, vector<1x128xf32>
    %cst_25 = arith.constant dense<0.000000e+00> : vector<128xf32>
    %43 = vector.multi_reduction <add>, %37, %cst_25 [0] : vector<128x128xf32> to vector<128xf32>
    %44 = vector.shape_cast %43 : vector<128xf32> to vector<1x128xf32>
    %45 = arith.addf %42, %44 : vector<1x128xf32>
    %c0_26 = arith.constant 0 : index
    %c0_27 = arith.constant 0 : index
    %46 = vector.load %arg11[%c0_26, %c0_27] : memref<1x128xf32, #tpu.memory_space<vmem>>, vector<1x128xf32>
    tpu.vector_store %arg11[%c0_26, %c0_27], %45 {strides = array<i32>} : memref<1x128xf32, #tpu.memory_space<vmem>>, vector<1x128xf32>,
    %c0_28 = arith.constant 0 : index
    %c0_29 = arith.constant 0 : index
    %47 = vector.load %arg12[%c0_28, %c0_29] : memref<1x128xf32, #tpu.memory_space<vmem>>, vector<1x128xf32>
    %48 = arith.mulf %37, %37 : vector<128x128xf32>
    %cst_30 = arith.constant dense<0.000000e+00> : vector<128xf32>
    %49 = vector.multi_reduction <add>, %48, %cst_30 [0] : vector<128x128xf32> to vector<128xf32>
    %50 = vector.shape_cast %49 : vector<128xf32> to vector<1x128xf32>
    %51 = arith.addf %47, %50 : vector<1x128xf32>
    %c0_31 = arith.constant 0 : index
    %c0_32 = arith.constant 0 : index
    %52 = vector.load %arg12[%c0_31, %c0_32] : memref<1x128xf32, #tpu.memory_space<vmem>>, vector<1x128xf32>
    tpu.vector_store %arg12[%c0_31, %c0_32], %51 {strides = array<i32>} : memref<1x128xf32, #tpu.memory_space<vmem>>, vector<1x128xf32>,
    %c0_33 = arith.constant 0 : index
    %c0_34 = arith.constant 0 : index
    %53 = vector.load %arg13[%c0_33, %c0_34] : memref<2x128xf32, #tpu.memory_space<vmem>>, vector<2x128xf32>
    %c0_35 = arith.constant 0 : index
    %c0_36 = arith.constant 0 : index
    %54 = vector.load %arg4[%c0_35, %c0_36] : memref<2x128xf32, #tpu.memory_space<vmem>>, vector<2x128xf32>
    %cst_37 = arith.constant dense<0.000000e+00> : vector<2x128xf32>
    %55 = tpu.matmul %54, %37, %cst_37 {dimension_numbers = #tpu.dot_dimension_numbers<[1], [0], [0], [1], [0, 0, 1, 1], [], []>} : vector<2x128xf32>, vector<128x128xf32>, vector<2x128xf32> -> vector<2x128xf32>
    %56 = arith.addf %53, %55 : vector<2x128xf32>
    %c0_38 = arith.constant 0 : index
    %c0_39 = arith.constant 0 : index
    %57 = vector.load %arg13[%c0_38, %c0_39] : memref<2x128xf32, #tpu.memory_space<vmem>>, vector<2x128xf32>
    tpu.vector_store %arg13[%c0_38, %c0_39], %56 {strides = array<i32>} : memref<2x128xf32, #tpu.memory_space<vmem>>, vector<2x128xf32>,
    %c0_40 = arith.constant 0 : index
    %c0_41 = arith.constant 0 : index
    %58 = vector.load %arg14[%c0_40, %c0_41] : memref<2x1xf32, #tpu.memory_space<vmem>>, vector<2x1xf32>
    %c0_42 = arith.constant 0 : index
    %c0_43 = arith.constant 0 : index
    %59 = vector.load %arg4[%c0_42, %c0_43] : memref<2x128xf32, #tpu.memory_space<vmem>>, vector<2x128xf32>
    %cst_44 = arith.constant dense<0.000000e+00> : vector<2xf32>
    %60 = vector.multi_reduction <add>, %59, %cst_44 [1] : vector<2x128xf32> to vector<2xf32>
    %61 = vector.shape_cast %60 : vector<2xf32> to vector<2x1xf32>
    %62 = arith.addf %58, %61 : vector<2x1xf32>
    %c0_45 = arith.constant 0 : index
    %c0_46 = arith.constant 0 : index
    %63 = vector.load %arg14[%c0_45, %c0_46] : memref<2x1xf32, #tpu.memory_space<vmem>>, vector<2x1xf32>
    tpu.vector_store %arg14[%c0_45, %c0_46], %62 {strides = array<i32>} : memref<2x1xf32, #tpu.memory_space<vmem>>, vector<2x1xf32>,
    %c0_i32_47 = arith.constant 0 : i32
    %64 = arith.cmpi eq, %arg1, %c0_i32_47 : i32
    %65 = arith.extui %64 : i1 to i32
    %c0_i32_48 = arith.constant 0 : i32
    %66 = arith.cmpi ne, %65, %c0_i32_48 : i32
    scf.if %66 {
      %c0_49 = arith.constant 0 : index
      %c0_50 = arith.constant 0 : index
      %67 = vector.load %arg11[%c0_49, %c0_50] : memref<1x128xf32, #tpu.memory_space<vmem>>, vector<1x128xf32>
      %cst_51 = arith.constant 6.250000e-02 : f32
      %68 = vector.broadcast %cst_51 : f32 to vector<1x128xf32>
      %69 = arith.mulf %67, %68 : vector<1x128xf32>
      %c0_52 = arith.constant 0 : index
      %c0_53 = arith.constant 0 : index
      %70 = vector.load %arg12[%c0_52, %c0_53] : memref<1x128xf32, #tpu.memory_space<vmem>>, vector<1x128xf32>
      %cst_54 = arith.constant 6.250000e-02 : f32
      %71 = vector.broadcast %cst_54 : f32 to vector<1x128xf32>
      %72 = arith.mulf %70, %71 : vector<1x128xf32>
      %73 = arith.mulf %69, %69 : vector<1x128xf32>
      %74 = arith.subf %72, %73 : vector<1x128xf32>
      %cst_55 = arith.constant 0.000000e+00 : f32
      %75 = vector.broadcast %cst_55 : f32 to vector<1x128xf32>
      %76 = arith.maximumf %74, %75 : vector<1x128xf32>
      %cst_56 = arith.constant 9.99999974E-6 : f32
      %77 = vector.broadcast %cst_56 : f32 to vector<1x128xf32>
      %78 = arith.addf %76, %77 : vector<1x128xf32>
      %79 = math.rsqrt %78 : vector<1x128xf32>
      %80 = vector.extract_strided_slice %9 {offsets = [2, 0], sizes = [1, 128], strides = [1, 1]} : vector<4x128xf32> to vector<1x128xf32>
      %81 = arith.mulf %79, %80 : vector<1x128xf32>
      %82 = vector.extract_strided_slice %9 {offsets = [3, 0], sizes = [1, 128], strides = [1, 1]} : vector<4x128xf32> to vector<1x128xf32>
      %83 = arith.mulf %69, %81 : vector<1x128xf32>
      %84 = arith.subf %82, %83 : vector<1x128xf32>
      %c0_i32_57 = arith.constant 0 : i32
      %c128_i32_58 = arith.constant 128 : i32
      %85 = arith.muli %c0_i32_57, %c128_i32_58 : i32
      %86 = tpu.assume_multiple %85, 128 : i32
      %87 = arith.index_cast %86 : i32 to index
      %c0_59 = arith.constant 0 : index
      %88 = vector.load %arg10[%87, %c0_59] : memref<128x128xf32, #tpu.memory_space<vmem>>, vector<128x128xf32>
      %89 = vector.broadcast %81 : vector<1x128xf32> to vector<128x128xf32>
      %90 = arith.mulf %88, %89 : vector<128x128xf32>
      %91 = vector.broadcast %84 : vector<1x128xf32> to vector<128x128xf32>
      %92 = arith.addf %90, %91 : vector<128x128xf32>
      %93 = arith.index_cast %86 : i32 to index
      %c0_60 = arith.constant 0 : index
      %94 = vector.load %arg9[%93, %c0_60] : memref<128x128xf32, #tpu.memory_space<vmem>>, vector<128x128xf32>
      tpu.vector_store %arg9[%93, %c0_60], %92 {strides = array<i32>} : memref<128x128xf32, #tpu.memory_space<vmem>>, vector<128x128xf32>,
      %c1_i32 = arith.constant 1 : i32
      %c0_61 = arith.constant 0 : index
      %c0_62 = arith.constant 0 : index
      %95 = vector.load %arg13[%c0_61, %c0_62] : memref<2x128xf32, #tpu.memory_space<vmem>>, vector<2x128xf32>
      %96 = vector.broadcast %81 : vector<1x128xf32> to vector<2x128xf32>
      %97 = arith.mulf %95, %96 : vector<2x128xf32>
      %c0_63 = arith.constant 0 : index
      %c0_64 = arith.constant 0 : index
      %98 = vector.load %arg14[%c0_63, %c0_64] : memref<2x1xf32, #tpu.memory_space<vmem>>, vector<2x1xf32>
      %99 = vector.broadcast %98 : vector<2x1xf32> to vector<2x128xf32>
      %100 = vector.broadcast %84 : vector<1x128xf32> to vector<2x128xf32>
      %101 = arith.mulf %99, %100 : vector<2x128xf32>
      %102 = arith.addf %97, %101 : vector<2x128xf32>
      %c0_65 = arith.constant 0 : index
      %c0_66 = arith.constant 0 : index
      %c0_67 = arith.constant 0 : index
      %103 = vector.load %arg8[%c0_65, %c0_66, %c0_67] : memref<1x2x128xf32, #tpu.memory_space<vmem>>, vector<1x2x128xf32>
      %104 = vector.shape_cast %103 : vector<1x2x128xf32> to vector<2x128xf32>
      %105 = vector.shape_cast %102 : vector<2x128xf32> to vector<1x2x128xf32>
      tpu.vector_store %arg8[%c0_65, %c0_66, %c0_67], %105 {strides = array<i32>} : memref<1x2x128xf32, #tpu.memory_space<vmem>>, vector<1x2x128xf32>,
    } else {
    }
    return
  }
  func.func @transform_1(%arg0: i32, %arg1: i32) -> (i32, i32) {
    %c0_i32 = arith.constant 0 : i32
    %c0_i32_0 = arith.constant 0 : i32
    return %arg1, %c0_i32 : i32, i32
  }
  func.func @transform_2(%arg0: i32, %arg1: i32) -> (i32, i32) {
    %c0_i32 = arith.constant 0 : i32
    %c0_i32_0 = arith.constant 0 : i32
    return %c0_i32, %arg1 : i32, i32
  }
  func.func @transform_3(%arg0: i32, %arg1: i32) -> (i32, i32, i32) {
    %c0_i32 = arith.constant 0 : i32
    %c0_i32_0 = arith.constant 0 : i32
    %c0_i32_1 = arith.constant 0 : i32
    return %arg0, %c0_i32, %c0_i32_0 : i32, i32, i32
  }
  func.func @transform_4(%arg0: i32, %arg1: i32) -> (i32, i32, i32) {
    %c0_i32 = arith.constant 0 : i32
    %c0_i32_0 = arith.constant 0 : i32
    %c0_i32_1 = arith.constant 0 : i32
    return %arg0, %c0_i32, %c0_i32_0 : i32, i32, i32
  }
  func.func @transform_5(%arg0: i32, %arg1: i32) -> (i32, i32, i32) {
    %c0_i32 = arith.constant 0 : i32
    %c0_i32_0 = arith.constant 0 : i32
    %c0_i32_1 = arith.constant 0 : i32
    return %arg0, %c0_i32, %c0_i32_0 : i32, i32, i32
  }
  func.func @transform_6(%arg0: i32, %arg1: i32) -> (i32, i32, i32) {
    %c0_i32 = arith.constant 0 : i32
    %c0_i32_0 = arith.constant 0 : i32
    %c0_i32_1 = arith.constant 0 : i32
    return %arg0, %c0_i32, %c0_i32_0 : i32, i32, i32
  }
}

</mosaic_0001>

<llo_original>
// kernel: tpu_custom_call.1
$region0: #{tpu_custom_call.1}
  #allocation0 [shape = 'u32[]', space=smem, size = 0x4, offset = 0x4, fixed_abs, tag = 'smem constant byte address 0x4 - core index']
  #allocation1 [shape = 'u32[144,128]{1,0:T(1,128)}', space=vmem, size = 0x12000, scoped, tag = 'internal scratch']
  #allocation2 [shape = 'f32[128,128]{1,0:T(8,128)}', space=vmem, size = 0x10000, scoped, tag = 'scratch operand']
  #allocation3 [shape = 'f32[128,128]{1,0:T(8,128)}', space=vmem, size = 0x10000, scoped, tag = 'scratch operand']
  #allocation4 [shape = 'f32[1,128]{1,0:T(1,128)}', space=vmem, size = 0x200, scoped, tag = 'scratch operand']
  #allocation5 [shape = 'f32[1,128]{1,0:T(1,128)}', space=vmem, size = 0x200, scoped, tag = 'scratch operand']
  #allocation6 [shape = 'f32[2,128]{1,0:T(2,128)}', space=vmem, size = 0x400, scoped, tag = 'scratch operand']
  #allocation7 [shape = 'f32[2,1]{1,0:T(2,128)}', space=vmem, size = 0x400, scoped, tag = 'scratch operand']
  #allocation18 [shape = 's32[]', space=sflag, size = 0x4, offset = 0, fixed_abs, tag = 'sflag constant byte address 0x0 - dummy sync flag']
  #allocation19 [shape = 's32[]', space=sflag, size = 0x4, offset = 0, fixed_abs, tag = 'sflag constant byte address 0x0 - dummy sync flag']
  #allocation20 [shape = 'u32[]', space=smem, size = 0x4, offset = 0x44, fixed_abs, tag = 'smem constant byte address 0x44 - assertion arg 0']
  #allocation21 [shape = 'u32[]', space=smem, size = 0x4, offset = 0x48, fixed_abs, tag = 'smem constant byte address 0x48 - assertion arg 1']
  %s0 = inlined_call_operand.hbm [shape: f32[128,128], index: 0, kind: input, shape index: {}]
  %s1 = inlined_call_operand.hbm [shape: bf16[128,128], index: 1, kind: input, shape index: {}]
  %s2 = inlined_call_operand.vmem [shape: f32[2,128], index: 2, kind: input, shape index: {}]
  %s3 = inlined_call_operand.hbm [shape: f32[3,128,128], index: 3, kind: input, shape index: {}]
  %s4 = inlined_call_operand.hbm [shape: f32[3,128,128], index: 4, kind: input, shape index: {}]
  %s5 = inlined_call_operand.hbm [shape: f32[3,4,128], index: 5, kind: input, shape index: {}]
  %s6 = inlined_call_operand.hbm [shape: f32[3,2,128], index: 6, kind: output, shape index: {}]
  %s7 = sld [smem:[#allocation0]]
  $region86: #{tpu_custom_call.1} parent=0
    _
  %s9 = ssub.s32 1, %s7
  %s10 = scalar_select 0, %s9, %s7
  $region1: #{tpu_custom_call.1} parent=0
    #allocation8 [shape = 'u8[32768]{0}', space=vmem, size = 0x8000, scoped, tag = 'input window, operand 1, single buffered']
    #allocation9 [shape = 's32[2]{0}', space=sflag, size = 0x8, scoped, tag = 'scoped memory for tpu_custom_call.1']
    #allocation10 [shape = 's32[2]{0}', space=sflag, size = 0x8, scoped, tag = 'scoped memory for tpu_custom_call.1']
    #allocation11 [shape = 'u8[131072]{0}', space=vmem, size = 0x20000, scoped, tag = 'input window, operand 3']
    #allocation12 [shape = 's32[2]{0}', space=sflag, size = 0x8, scoped, tag = 'scoped memory for tpu_custom_call.1']
    #allocation13 [shape = 'u8[131072]{0}', space=vmem, size = 0x20000, scoped, tag = 'input window, operand 4']
    #allocation14 [shape = 'u8[4096]{0}', space=vmem, size = 0x1000, scoped, tag = 'input window, operand 5']
    #allocation15 [shape = 's32[2]{0}', space=sflag, size = 0x8, scoped, tag = 'scoped memory for tpu_custom_call.1']
    #allocation16 [shape = 'u8[2048]{0}', space=vmem, size = 0x800, scoped, tag = 'output window, operand 0']
    %11 = vsyncpa [#allocation9], 0
    %12 = vsyncpa [#allocation12], 0
    %s13 = scalar_lea.sflag [#allocation12], 1
    %14 = vsyncpa %s13, 0
    %15 = vsyncpa [#allocation15], 0
    %s16 = scalar_lea.sflag [#allocation15], 1
    %17 = vsyncpa %s16, 0
    %18 = vsyncpa [#allocation10], 0
    %s19 = scalar_lea.sflag [#allocation10], 1
    %20 = vsyncpa %s19, 0
    loop: start=0, step=1, limit=5
    $region2: #{tpu_custom_call.1} parent=1 // loop_pre_header
      _
    $region3: #{tpu_custom_call.1} parent=1 // loop_header
      %s22 = sphi 0, %s26
      %p23 = scmp.ge.s32.totalorder %s22, 5
      %s29 = sphi 0, %s41
      %s30 = sphi 0, %s37
      %s31 = sphi 0, %s29
      %s32 = sphi 0, %s30
      %s33 = sphi 0, %s31
      %s34 = sphi 0, %s32
      %s44 = sphi 0, %s46
      %s47 = sphi 0, %s44
      %s48 = sphi 0, %s47
      %s64 = sphi 0, %s48
      %s70 = sphi 0, %s72
      %s73 = sphi 0, %s70
      %s74 = sphi 0, %s73
      %s90 = sphi 0, %s74
      %s96 = sphi 0, %s98
      %s99 = sphi 0, %s96
      %s100 = sphi 0, %s99
      %s116 = sphi 0, %s100
      %s122 = sphi 0, %s124
      %s125 = sphi 0, %s122
      %s126 = sphi 0, %s125
      %s142 = sphi 0, %s126
      %s148 = sphi 0, %s150
      %s151 = sphi 0, %s148
      %s152 = sphi 0, %s151
      %s168 = sphi 0, %s152
      %s174 = sphi 0, %s176
      %s177 = sphi 0, %s174
      %s178 = sphi 0, %s177
      %s194 = sphi 0, %s178
    $region4: #{tpu_custom_call.1} parent=1 // loop_header_branch
      %25 = sbr.rel (%p23) target = $region8
    $region5: #{tpu_custom_call.1} parent=1 // loop_body
      %s27 = ssub.s32 %s22, 1
      %s28 = ssub.s32 %s22, 2
      %s35 = sadd.s32 1, %s30
      %p36 = scmp.ge.s32.totalorder %s35, 1
      %s37 = scalar_select %p36, 0, %s35
      %s38 = sadd.s32 1, %s29
      %s39 = scalar_select %p36, %s38, %s29
      %p40 = scmp.ge.s32.totalorder %s39, 3
      %s41 = scalar_select %p40, 0, %s39
      %s42 = ssub.s32 %s30, %s37
      %p43 = scmp.eq.s32.totalorder %s42, 0
      %s45 = sadd.s32 %s44, 1
      %s46 = scalar_select %p43, %s44, %s45
      %p49 = pneg %p43
      %p50 = scmp.eq.s32.totalorder %s22, 2
      %p51 = por %p49, %p50
      %p52 = scmp.ne.s32.totalorder %s44, %s47
      %p53 = scmp.eq.s32.totalorder %s22, 0
      %p54 = por %p52, %p53
      %p55 = scmp.ne.s32.totalorder %s44, %s47
      %p56 = scmp.eq.s32.totalorder %s27, 2
      %p57 = por %p55, %p56
      %p58 = scmp.ne.s32.totalorder %s47, %s48
      %p59 = scmp.eq.s32.totalorder %s27, 0
      %p60 = por %p58, %p59
      %p61 = scmp.ne.s32.totalorder %s47, %s48
      %p62 = scmp.eq.s32.totalorder %s28, 2
      %p63 = por %p61, %p62
      %p65 = scmp.ne.s32.totalorder %s48, %s64
      %p66 = scmp.eq.s32.totalorder %s28, 0
      %p67 = por %p65, %p66
      %s68 = ssub.s32 %s30, %s37
      %p69 = scmp.eq.s32.totalorder %s68, 0
      %s71 = sadd.s32 %s70, 1
      %s72 = scalar_select %p69, %s70, %s71
      %p75 = pneg %p69
      %p76 = scmp.eq.s32.totalorder %s22, 2
      %p77 = por %p75, %p76
      %p78 = scmp.ne.s32.totalorder %s70, %s73
      %p79 = scmp.eq.s32.totalorder %s22, 0
      %p80 = por %p78, %p79
      %p81 = scmp.ne.s32.totalorder %s70, %s73
      %p82 = scmp.eq.s32.totalorder %s27, 2
      %p83 = por %p81, %p82
      %p84 = scmp.ne.s32.totalorder %s73, %s74
      %p85 = scmp.eq.s32.totalorder %s27, 0
      %p86 = por %p84, %p85
      %p87 = scmp.ne.s32.totalorder %s73, %s74
      %p88 = scmp.eq.s32.totalorder %s28, 2
      %p89 = por %p87, %p88
      %p91 = scmp.ne.s32.totalorder %s74, %s90
      %p92 = scmp.eq.s32.totalorder %s28, 0
      %p93 = por %p91, %p92
      %s94 = ssub.s32 %s29, %s41
      %p95 = scmp.eq.s32.totalorder %s94, 0
      %s97 = sadd.s32 %s96, 1
      %s98 = scalar_select %p95, %s96, %s97
      %p101 = pneg %p95
      %p102 = scmp.eq.s32.totalorder %s22, 2
      %p103 = por %p101, %p102
      %p104 = scmp.ne.s32.totalorder %s96, %s99
      %p105 = scmp.eq.s32.totalorder %s22, 0
      %p106 = por %p104, %p105
      %p107 = scmp.ne.s32.totalorder %s96, %s99
      %p108 = scmp.eq.s32.totalorder %s27, 2
      %p109 = por %p107, %p108
      %p110 = scmp.ne.s32.totalorder %s99, %s100
      %p111 = scmp.eq.s32.totalorder %s27, 0
      %p112 = por %p110, %p111
      %p113 = scmp.ne.s32.totalorder %s99, %s100
      %p114 = scmp.eq.s32.totalorder %s28, 2
      %p115 = por %p113, %p114
      %p117 = scmp.ne.s32.totalorder %s100, %s116
      %p118 = scmp.eq.s32.totalorder %s28, 0
      %p119 = por %p117, %p118
      %s120 = ssub.s32 %s29, %s41
      %p121 = scmp.eq.s32.totalorder %s120, 0
      %s123 = sadd.s32 %s122, 1
      %s124 = scalar_select %p121, %s122, %s123
      %p127 = pneg %p121
      %p128 = scmp.eq.s32.totalorder %s22, 2
      %p129 = por %p127, %p128
      %p130 = scmp.ne.s32.totalorder %s122, %s125
      %p131 = scmp.eq.s32.totalorder %s22, 0
      %p132 = por %p130, %p131
      %p133 = scmp.ne.s32.totalorder %s122, %s125
      %p134 = scmp.eq.s32.totalorder %s27, 2
      %p135 = por %p133, %p134
      %p136 = scmp.ne.s32.totalorder %s125, %s126
      %p137 = scmp.eq.s32.totalorder %s27, 0
      %p138 = por %p136, %p137
      %p139 = scmp.ne.s32.totalorder %s125, %s126
      %p140 = scmp.eq.s32.totalorder %s28, 2
      %p141 = por %p139, %p140
      %p143 = scmp.ne.s32.totalorder %s126, %s142
      %p144 = scmp.eq.s32.totalorder %s28, 0
      %p145 = por %p143, %p144
      %s146 = ssub.s32 %s29, %s41
      %p147 = scmp.eq.s32.totalorder %s146, 0
      %s149 = sadd.s32 %s148, 1
      %s150 = scalar_select %p147, %s148, %s149
      %p153 = pneg %p147
      %p154 = scmp.eq.s32.totalorder %s22, 2
      %p155 = por %p153, %p154
      %p156 = scmp.ne.s32.totalorder %s148, %s151
      %p157 = scmp.eq.s32.totalorder %s22, 0
      %p158 = por %p156, %p157
      %p159 = scmp.ne.s32.totalorder %s148, %s151
      %p160 = scmp.eq.s32.totalorder %s27, 2
      %p161 = por %p159, %p160
      %p162 = scmp.ne.s32.totalorder %s151, %s152
      %p163 = scmp.eq.s32.totalorder %s27, 0
      %p164 = por %p162, %p163
      %p165 = scmp.ne.s32.totalorder %s151, %s152
      %p166 = scmp.eq.s32.totalorder %s28, 2
      %p167 = por %p165, %p166
      %p169 = scmp.ne.s32.totalorder %s152, %s168
      %p170 = scmp.eq.s32.totalorder %s28, 0
      %p171 = por %p169, %p170
      %s172 = ssub.s32 %s29, %s41
      %p173 = scmp.eq.s32.totalorder %s172, 0
      %s175 = sadd.s32 %s174, 1
      %s176 = scalar_select %p173, %s174, %s175
      %p179 = pneg %p173
      %p180 = scmp.eq.s32.totalorder %s22, 2
      %p181 = por %p179, %p180
      %p182 = scmp.ne.s32.totalorder %s174, %s177
      %p183 = scmp.eq.s32.totalorder %s22, 0
      %p184 = por %p182, %p183
      %p185 = scmp.ne.s32.totalorder %s174, %s177
      %p186 = scmp.eq.s32.totalorder %s27, 2
      %p187 = por %p185, %p186
      %p188 = scmp.ne.s32.totalorder %s177, %s178
      %p189 = scmp.eq.s32.totalorder %s27, 0
      %p190 = por %p188, %p189
      %p191 = scmp.ne.s32.totalorder %s177, %s178
      %p192 = scmp.eq.s32.totalorder %s28, 2
      %p193 = por %p191, %p192
      %p195 = scmp.ne.s32.totalorder %s178, %s194
      %p196 = scmp.eq.s32.totalorder %s28, 0
      %p197 = por %p195, %p196
      %p198 = scmp.le.s32.totalorder 1, %s22
      %p199 = scmp.lt.s32.totalorder %s22, 4
      %p200 = pnand %p198, %p199
      %p201 = pneg %p200
      // Predicated region
      $region9: #{tpu_custom_call.1} parent=5 // pred_check
        _
      $region10: #{tpu_custom_call.1} parent=5 // pred_check_branch
        %203 = sbr.rel (%p200) target = $region12
      $region11: #{tpu_custom_call.1} parent=5 // pred_region
        %s204 = ssub.s32 %s22, 1
        // Predicated region
        $region13: #{tpu_custom_call.1} parent=11 // pred_check
          %p205 = pneg %p60
        $region14: #{tpu_custom_call.1} parent=11 // pred_check_branch
          %207 = sbr.rel (%p205) target = $region16
        $region15: #{tpu_custom_call.1} parent=11 // pred_region
          %s208 = smul.u32 16, %s32
          %s210 = ssub.s32 1024, 1024
          %211 = vsyncadd [#allocation9], %s210
          %s212 = smul.addr %s208, 64
          %s213 = scalar_lea.hbm %s1, %s212
          %s214 = sshll.u32 [#allocation8], 4
          %s215 = int_to_ptr.vmem [resolvable:$true] %s214
          %220 = dma.hbm_to_vmem [thread:$0]  %s213, 1024, %s215, [#allocation9], 64, 64, 4
        $region16: #{tpu_custom_call.1} parent=11 // pred_fallthru
          _
        // Predicated region
        $region17: #{tpu_custom_call.1} parent=11 // pred_check
          %p221 = pneg %p86
        $region18: #{tpu_custom_call.1} parent=11 // pred_check_branch
          %223 = sbr.rel (%p221) target = $region20
        $region19: #{tpu_custom_call.1} parent=11 // pred_region
          %p224 = scmp.lt.s32.totalorder %s32, 0
          %s225 = scalar_select %p224, %s32, 0
          %s226 = smul.addr %s225, 2
          %s227 = scalar_lea.vmem %s2, %s226
        $region20: #{tpu_custom_call.1} parent=11 // pred_fallthru
          _
      $region12: #{tpu_custom_call.1} parent=5 // pred_fallthru
        _
      %p228 = scmp.lt.s32.totalorder %s22, 3
      // Predicated region
      $region21: #{tpu_custom_call.1} parent=5 // pred_check
        %p229 = pneg %p228
      $region22: #{tpu_custom_call.1} parent=5 // pred_check_branch
        %231 = sbr.rel (%p229) target = $region24
      $region23: #{tpu_custom_call.1} parent=5 // pred_region
        // Predicated region
        $region25: #{tpu_custom_call.1} parent=23 // pred_check
          %p232 = pneg %p106
        $region26: #{tpu_custom_call.1} parent=23 // pred_check_branch
          %234 = sbr.rel (%p232) target = $region28
        $region27: #{tpu_custom_call.1} parent=23 // pred_region
          %s235 = sand.u32 %s22, 1
          %s236 = scalar_lea.sflag [#allocation12], %s235
          %s237 = sand.u32 %s96, 1
          %s238 = smul.addr %s237, 128
          %s239 = scalar_lea.vmem [#allocation11], %s238
          %s241 = ssub.s32 2048, 2048
          %242 = vsyncadd %s236, %s241
          %s243 = smul.addr %s29, 16
          %s244 = smul.addr %s243, 128
          %s245 = scalar_lea.hbm %s3, %s244
          %s246 = sshll.u32 %s239, 4
          %s247 = int_to_ptr.vmem [resolvable:$true] %s246
          %252 = dma.hbm_to_vmem [thread:$0]  %s245, 2048, %s247, %s236, 128, 128, 8
        $region28: #{tpu_custom_call.1} parent=23 // pred_fallthru
          _
        // Predicated region
        $region29: #{tpu_custom_call.1} parent=23 // pred_check
          %p253 = pneg %p132
        $region30: #{tpu_custom_call.1} parent=23 // pred_check_branch
          %255 = sbr.rel (%p253) target = $region32
        $region31: #{tpu_custom_call.1} parent=23 // pred_region
          %s256 = sand.u32 %s22, 1
          %s257 = scalar_lea.sflag [#allocation12], %s256
          %s258 = sand.u32 %s122, 1
          %s259 = smul.addr %s258, 128
          %s260 = scalar_lea.vmem [#allocation13], %s259
          %s262 = ssub.s32 2048, 2048
          %263 = vsyncadd %s257, %s262
          %s264 = smul.addr %s29, 16
          %s265 = smul.addr %s264, 128
          %s266 = scalar_lea.hbm %s4, %s265
          %s267 = sshll.u32 %s260, 4
          %s268 = int_to_ptr.vmem [resolvable:$true] %s267
          %273 = dma.hbm_to_vmem [thread:$0]  %s266, 2048, %s268, %s257, 128, 128, 8
        $region32: #{tpu_custom_call.1} parent=23 // pred_fallthru
          _
        // Predicated region
        $region33: #{tpu_custom_call.1} parent=23 // pred_check
          %p274 = pneg %p158
        $region34: #{tpu_custom_call.1} parent=23 // pred_check_branch
          %276 = sbr.rel (%p274) target = $region36
        $region35: #{tpu_custom_call.1} parent=23 // pred_region
          %s277 = sand.u32 %s148, 1
          %s278 = scalar_lea.sflag [#allocation15], %s277
          %s279 = sand.u32 %s148, 1
          %s280 = smul.addr %s279, 4
          %s281 = scalar_lea.vmem [#allocation14], %s280
          %s283 = ssub.s32 64, 64
          %284 = vsyncadd %s278, %s283
          %s285 = smul.addr %s29, 64
          %s286 = scalar_lea.hbm %s5, %s285
          %s288 = sshll.u32 %s281, 4
          %s289 = int_to_ptr.vmem [resolvable:$true] %s288
          %291 = dma.hbm_to_vmem [thread:$0]  %s286, 64, %s289, %s278
        $region36: #{tpu_custom_call.1} parent=23 // pred_fallthru
          _
      $region24: #{tpu_custom_call.1} parent=5 // pred_fallthru
        _
      %p292 = scmp.le.s32.totalorder 1, %s22
      %p293 = scmp.lt.s32.totalorder %s22, 4
      %p294 = pnand %p292, %p293
      %p295 = pneg %p294
      // Predicated region
      $region37: #{tpu_custom_call.1} parent=5 // pred_check
        _
      $region38: #{tpu_custom_call.1} parent=5 // pred_check_branch
        %297 = sbr.rel (%p294) target = $region40
      $region39: #{tpu_custom_call.1} parent=5 // pred_region
        %s298 = ssub.s32 %s22, 1
        // Predicated region
        $region41: #{tpu_custom_call.1} parent=39 // pred_check
          %p299 = pneg %p60
        $region42: #{tpu_custom_call.1} parent=39 // pred_check_branch
          %301 = sbr.rel (%p299) target = $region44
        $region43: #{tpu_custom_call.1} parent=39 // pred_region
          %302 = dma.done [#allocation9], 1024
        $region44: #{tpu_custom_call.1} parent=39 // pred_fallthru
          _
        %s303 = sand.u32 %s27, 1
        %s304 = scalar_lea.sflag [#allocation12], %s303
        %s305 = sand.u32 %s99, 1
        %s306 = smul.addr %s305, 128
        %s307 = scalar_lea.vmem [#allocation11], %s306
        // Predicated region
        $region45: #{tpu_custom_call.1} parent=39 // pred_check
          %p308 = pneg %p112
        $region46: #{tpu_custom_call.1} parent=39 // pred_check_branch
          %310 = sbr.rel (%p308) target = $region48
        $region47: #{tpu_custom_call.1} parent=39 // pred_region
          %311 = dma.done %s304, 2048
        $region48: #{tpu_custom_call.1} parent=39 // pred_fallthru
          _
        %s312 = sand.u32 %s27, 1
        %s313 = scalar_lea.sflag [#allocation12], %s312
        %s314 = sand.u32 %s125, 1
        %s315 = smul.addr %s314, 128
        %s316 = scalar_lea.vmem [#allocation13], %s315
        // Predicated region
        $region49: #{tpu_custom_call.1} parent=39 // pred_check
          %p317 = pneg %p138
        $region50: #{tpu_custom_call.1} parent=39 // pred_check_branch
          %319 = sbr.rel (%p317) target = $region52
        $region51: #{tpu_custom_call.1} parent=39 // pred_region
          %320 = dma.done %s313, 2048
        $region52: #{tpu_custom_call.1} parent=39 // pred_fallthru
          _
        %s321 = sand.u32 %s151, 1
        %s322 = scalar_lea.sflag [#allocation15], %s321
        %s323 = sand.u32 %s151, 1
        %s324 = smul.addr %s323, 4
        %s325 = scalar_lea.vmem [#allocation14], %s324
        // Predicated region
        $region53: #{tpu_custom_call.1} parent=39 // pred_check
          %p326 = pneg %p164
        $region54: #{tpu_custom_call.1} parent=39 // pred_check_branch
          %328 = sbr.rel (%p326) target = $region56
        $region55: #{tpu_custom_call.1} parent=39 // pred_region
          %329 = dma.done %s322, 64
        $region56: #{tpu_custom_call.1} parent=39 // pred_fallthru
          _
        %p330 = pneg %p60
        %p331 = pneg %p57
        %p332 = scmp.lt.s32.totalorder %s32, 0
        %s333 = scalar_select %p332, %s32, 0
        %s334 = smul.addr %s333, 2
        %s335 = scalar_lea.vmem %s2, %s334
        %p336 = pneg %p86
        %p337 = pneg %p83
        %s338 = sand.u32 %s27, 1
        %s339 = scalar_lea.sflag [#allocation12], %s338
        %s340 = sand.u32 %s99, 1
        %s341 = smul.addr %s340, 128
        %s342 = scalar_lea.vmem [#allocation11], %s341
        %p343 = pneg %p112
        %p344 = pneg %p109
        %s345 = sand.u32 %s27, 1
        %s346 = scalar_lea.sflag [#allocation12], %s345
        %s347 = sand.u32 %s125, 1
        %s348 = smul.addr %s347, 128
        %s349 = scalar_lea.vmem [#allocation13], %s348
        %p350 = pneg %p138
        %p351 = pneg %p135
        %s352 = sand.u32 %s151, 1
        %s353 = scalar_lea.sflag [#allocation15], %s352
        %s354 = sand.u32 %s151, 1
        %s355 = smul.addr %s354, 4
        %s356 = scalar_lea.vmem [#allocation14], %s355
        %p357 = pneg %p164
        %p358 = pneg %p161
        %p359 = pneg %p190
        %p360 = pneg %p187
        %s361 = sand.u32 %s177, 1
        %s362 = scalar_lea.sflag [#allocation10], %s361
        %s363 = sand.u32 %s177, 1
        %s364 = smul.addr %s363, 2
        %s365 = scalar_lea.vmem [#allocation16], %s364
        %s366 = smul.u32 16, %s32
        %p367 = scmp.lt.s32.totalorder %s32, 0
        %s368 = scalar_select %p367, %s32, 0
        %s369 = smul.addr %s368, 2
        %s370 = scalar_lea.vmem %s2, %s369
        %p371 = scmp.eq.s32.totalorder %s31, 0
        %p372 = scmp.eq.s32.totalorder %s32, 0
        %p373 = pnand %p371, %p372
        %p374 = pneg %p373
        // Predicated region
        $region57: #{tpu_custom_call.1} parent=39 // pred_check
          _
        $region58: #{tpu_custom_call.1} parent=39 // pred_check_branch
          %376 = sbr.rel (%p373) target = $region60
        $region59: #{tpu_custom_call.1} parent=39 // pred_region
          $region61: #{tpu_custom_call.1} parent=59
            #allocation17 [shape = 's32[1]{0}', space=sflag, size = 0x4, scoped, tag = 'scoped memory for tpu_custom_call.1']
            // Predicated region
            $region62: #{tpu_custom_call.1} parent=61 // pred_check
              _
            $region63: #{tpu_custom_call.1} parent=61 // pred_check_branch
              %378 = sbr.rel target = $region65
            $region64: #{tpu_custom_call.1} parent=61 // pred_region
              %379 = sst [smem:[#allocation20]] [#allocation19]
              %380 = sst [smem:[#allocation21]] [#allocation18]
            $region65: #{tpu_custom_call.1} parent=61 // pred_fallthru
              _
            %382 = shalt.err (0)
            %s384 = sshll.u32 [#allocation2], 4
            %s385 = int_to_ptr.vmem [resolvable:$true] %s384
            %387 = dma.hbm_to_vmem [thread:$0]  %s0, 2048, %s385, [#allocation17]
            %s388 = smul.u32 128, 1
            %s389 = sshll.u32 %s388, 4
            %390 = dma.done [#allocation17], %s389
        $region60: #{tpu_custom_call.1} parent=39 // pred_fallthru
          _
        // Predicated region
        $region66: #{tpu_custom_call.1} parent=39 // pred_check
          %p391 = pneg %p372
        $region67: #{tpu_custom_call.1} parent=39 // pred_check_branch
          %393 = sbr.rel (%p391) target = $region69
        $region68: #{tpu_custom_call.1} parent=39 // pred_region
          %394 = vst [vmem:[#allocation4] sm:$0x1] 0.0
          %395 = vst [vmem:[#allocation5] sm:$0x1] 0.0
          %396 = vst [vmem:[#allocation6] sm:$0x3] 0.0
          %vm397 = vcmask 1024
          %398 = vst.msk [vmem:[#allocation7] sm:$0x3] %vm397, 0.0
        $region69: #{tpu_custom_call.1} parent=39 // pred_fallthru
          _
        %v399 = vld [vmem:[%s325] sm:$0xf]
        %v400 = vld [vmem:[#allocation8] sm:$0xf]
        %v401 = vld [vmem:[#allocation8 + $0x4] sm:$0xf]
        %v402 = vld [vmem:[#allocation8 + $0x8] sm:$0xf]
        %v403 = vld [vmem:[#allocation8 + $0xc] sm:$0xf]
        %v404 = vld [vmem:[#allocation8 + $0x10] sm:$0xf]
        %v405 = vld [vmem:[#allocation8 + $0x14] sm:$0xf]
        %v406 = vld [vmem:[#allocation8 + $0x18] sm:$0xf]
        %v407 = vld [vmem:[#allocation8 + $0x1c] sm:$0xf]
        %v408 = vld [vmem:[#allocation8 + $0x20] sm:$0xf]
        %v409 = vld [vmem:[#allocation8 + $0x24] sm:$0xf]
        %v410 = vld [vmem:[#allocation8 + $0x28] sm:$0xf]
        %v411 = vld [vmem:[#allocation8 + $0x2c] sm:$0xf]
        %v412 = vld [vmem:[#allocation8 + $0x30] sm:$0xf]
        %v413 = vld [vmem:[#allocation8 + $0x34] sm:$0xf]
        %v414 = vld [vmem:[#allocation8 + $0x38] sm:$0xf]
        %v415 = vld [vmem:[#allocation8 + $0x3c] sm:$0xf]
        %v416 = vunpack.c.l.bf16 %v400
        %v417 = vunpack.c.l.bf16 %v401
        %v418 = vunpack.c.l.bf16 %v402
        %v419 = vunpack.c.l.bf16 %v403
        %v420 = vunpack.c.l.bf16 %v404
        %v421 = vunpack.c.l.bf16 %v405
        %v422 = vunpack.c.l.bf16 %v406
        %v423 = vunpack.c.l.bf16 %v407
        %v424 = vunpack.c.l.bf16 %v408
        %v425 = vunpack.c.l.bf16 %v409
        %v426 = vunpack.c.l.bf16 %v410
        %v427 = vunpack.c.l.bf16 %v411
        %v428 = vunpack.c.l.bf16 %v412
        %v429 = vunpack.c.l.bf16 %v413
        %v430 = vunpack.c.l.bf16 %v414
        %v431 = vunpack.c.l.bf16 %v415
        %v432 = vld [vmem:[#allocation2] sm:$0xff]
        %v433 = vld [vmem:[#allocation2 + $0x8] sm:$0xff]
        %v434 = vld [vmem:[#allocation2 + $0x10] sm:$0xff]
        %v435 = vld [vmem:[#allocation2 + $0x18] sm:$0xff]
        %v436 = vld [vmem:[#allocation2 + $0x20] sm:$0xff]
        %v437 = vld [vmem:[#allocation2 + $0x28] sm:$0xff]
        %v438 = vld [vmem:[#allocation2 + $0x30] sm:$0xff]
        %v439 = vld [vmem:[#allocation2 + $0x38] sm:$0xff]
        %v440 = vld [vmem:[#allocation2 + $0x40] sm:$0xff]
        %v441 = vld [vmem:[#allocation2 + $0x48] sm:$0xff]
        %v442 = vld [vmem:[#allocation2 + $0x50] sm:$0xff]
        %v443 = vld [vmem:[#allocation2 + $0x58] sm:$0xff]
        %v444 = vld [vmem:[#allocation2 + $0x60] sm:$0xff]
        %v445 = vld [vmem:[#allocation2 + $0x68] sm:$0xff]
        %v446 = vld [vmem:[#allocation2 + $0x70] sm:$0xff]
        %v447 = vld [vmem:[#allocation2 + $0x78] sm:$0xff]
        %448 = vmatprep.subr.mxu0 0.0
        %449 = vmatpush1.msra.mxu0 %v447
        %450 = vmatprep.subr.mxu0 0.0
        %451 = vmatpush1.msra.mxu0 %v446
        %452 = vmatprep.subr.mxu0 0.0
        %453 = vmatpush1.msra.mxu0 %v445
        %454 = vmatprep.subr.mxu0 0.0
        %455 = vmatpush1.msra.mxu0 %v444
        %456 = vmatprep.subr.mxu0 0.0
        %457 = vmatpush1.msra.mxu0 %v443
        %458 = vmatprep.subr.mxu0 0.0
        %459 = vmatpush1.msra.mxu0 %v442
        %460 = vmatprep.subr.mxu0 0.0
        %461 = vmatpush1.msra.mxu0 %v441
        %462 = vmatprep.subr.mxu0 0.0
        %463 = vmatpush1.msra.mxu0 %v440
        %464 = vmatprep.subr.mxu0 0.0
        %465 = vmatpush1.msra.mxu0 %v439
        %466 = vmatprep.subr.mxu0 0.0
        %467 = vmatpush1.msra.mxu0 %v438
        %468 = vmatprep.subr.mxu0 0.0
        %469 = vmatpush1.msra.mxu0 %v437
        %470 = vmatprep.subr.mxu0 0.0
        %471 = vmatpush1.msra.mxu0 %v436
        %472 = vmatprep.subr.mxu0 0.0
        %473 = vmatpush1.msra.mxu0 %v435
        %474 = vmatprep.subr.mxu0 0.0
        %475 = vmatpush1.msra.mxu0 %v434
        %476 = vmatprep.subr.mxu0 0.0
        %477 = vmatpush1.msra.mxu0 %v433
        %478 = vmatprep.subr.mxu0 0.0
        %479 = vmatpush1.msra.mxu0 %v432
        %480 = vmatprep.subr.mxu0 0.0
        %481 = vmatpush2.msra.mxu0 0.0
        %482 = vmatprep.subr.mxu0 0.0
        %483 = vmatpush2.msra.mxu0 0.0
        %484 = vmatprep.subr.mxu0 0.0
        %485 = vmatpush2.msra.mxu0 0.0
        %486 = vmatprep.subr.mxu0 0.0
        %487 = vmatpush2.msra.mxu0 0.0
        %488 = vmatprep.subr.mxu0 0.0
        %489 = vmatpush2.msra.mxu0 0.0
        %490 = vmatprep.subr.mxu0 0.0
        %491 = vmatpush2.msra.mxu0 0.0
        %492 = vmatprep.subr.mxu0 0.0
        %493 = vmatpush2.msra.mxu0 0.0
        %494 = vmatprep.subr.mxu0 0.0
        %495 = vmatpush2.msra.mxu0 0.0
        %496 = vmatprep.subr.mxu0 0.0
        %497 = vmatpush2.msra.mxu0 0.0
        %498 = vmatprep.subr.mxu0 0.0
        %499 = vmatpush2.msra.mxu0 0.0
        %500 = vmatprep.subr.mxu0 0.0
        %501 = vmatpush2.msra.mxu0 0.0
        %502 = vmatprep.subr.mxu0 0.0
        %503 = vmatpush2.msra.mxu0 0.0
        %504 = vmatprep.subr.mxu0 0.0
        %505 = vmatpush2.msra.mxu0 0.0
        %506 = vmatprep.subr.mxu0 0.0
        %507 = vmatpush2.msra.mxu0 0.0
        %508 = vmatprep.subr.mxu0 0.0
        %509 = vmatpush2.msra.mxu0 0.0
        %510 = vmatprep.subr.mxu0 0.0
        %511 = vmatpush2.msra.mxu0 0.0
        %512 = vmatprep.mubr.f32.mxu0 0.0
        %513 = vmatmul.mubr.f32.gmra.mxu0 %v416
        %v514 = vpop.f32.mrf.mxu0
        %v515 = vadd.f32 0.0, %v514
        %v516 = vpop.f32.mrf.mxu0
        %517 = vmatprep.mubr.f32.mxu0 0.0
        %518 = vmatmul.mubr.f32.gmra.mxu0 %v417
        %v519 = vpop.f32.mrf.mxu0
        %v520 = vadd.f32 0.0, %v519
        %v521 = vpop.f32.mrf.mxu0
        %522 = vmatprep.mubr.f32.mxu0 0.0
        %523 = vmatmul.mubr.f32.gmra.mxu0 %v418
        %v524 = vpop.f32.mrf.mxu0
        %v525 = vadd.f32 0.0, %v524
        %v526 = vpop.f32.mrf.mxu0
        %527 = vmatprep.mubr.f32.mxu0 0.0
        %528 = vmatmul.mubr.f32.gmra.mxu0 %v419
        %v529 = vpop.f32.mrf.mxu0
        %v530 = vadd.f32 0.0, %v529
        %v531 = vpop.f32.mrf.mxu0
        %532 = vmatprep.mubr.f32.mxu0 0.0
        %533 = vmatmul.mubr.f32.gmra.mxu0 %v420
        %v534 = vpop.f32.mrf.mxu0
        %v535 = vadd.f32 0.0, %v534
        %v536 = vpop.f32.mrf.mxu0
        %537 = vmatprep.mubr.f32.mxu0 0.0
        %538 = vmatmul.mubr.f32.gmra.mxu0 %v421
        %v539 = vpop.f32.mrf.mxu0
        %v540 = vadd.f32 0.0, %v539
        %v541 = vpop.f32.mrf.mxu0
        %542 = vmatprep.mubr.f32.mxu0 0.0
        %543 = vmatmul.mubr.f32.gmra.mxu0 %v422
        %v544 = vpop.f32.mrf.mxu0
        %v545 = vadd.f32 0.0, %v544
        %v546 = vpop.f32.mrf.mxu0
        %547 = vmatprep.mubr.f32.mxu0 0.0
        %548 = vmatmul.mubr.f32.gmra.mxu0 %v423
        %v549 = vpop.f32.mrf.mxu0
        %v550 = vadd.f32 0.0, %v549
        %v551 = vpop.f32.mrf.mxu0
        %552 = vmatprep.mubr.f32.mxu0 0.0
        %553 = vmatmul.mubr.f32.gmra.mxu0 %v424
        %v554 = vpop.f32.mrf.mxu0
        %v555 = vadd.f32 0.0, %v554
        %v556 = vpop.f32.mrf.mxu0
        %557 = vmatprep.mubr.f32.mxu0 0.0
        %558 = vmatmul.mubr.f32.gmra.mxu0 %v425
        %v559 = vpop.f32.mrf.mxu0
        %v560 = vadd.f32 0.0, %v559
        %v561 = vpop.f32.mrf.mxu0
        %562 = vmatprep.mubr.f32.mxu0 0.0
        %563 = vmatmul.mubr.f32.gmra.mxu0 %v426
        %v564 = vpop.f32.mrf.mxu0
        %v565 = vadd.f32 0.0, %v564
        %v566 = vpop.f32.mrf.mxu0
        %567 = vmatprep.mubr.f32.mxu0 0.0
        %568 = vmatmul.mubr.f32.gmra.mxu0 %v427
        %v569 = vpop.f32.mrf.mxu0
        %v570 = vadd.f32 0.0, %v569
        %v571 = vpop.f32.mrf.mxu0
        %572 = vmatprep.mubr.f32.mxu0 0.0
        %573 = vmatmul.mubr.f32.gmra.mxu0 %v428
        %v574 = vpop.f32.mrf.mxu0
        %v575 = vadd.f32 0.0, %v574
        %v576 = vpop.f32.mrf.mxu0
        %577 = vmatprep.mubr.f32.mxu0 0.0
        %578 = vmatmul.mubr.f32.gmra.mxu0 %v429
        %v579 = vpop.f32.mrf.mxu0
        %v580 = vadd.f32 0.0, %v579
        %v581 = vpop.f32.mrf.mxu0
        %582 = vmatprep.mubr.f32.mxu0 0.0
        %583 = vmatmul.mubr.f32.gmra.mxu0 %v430
        %v584 = vpop.f32.mrf.mxu0
        %v585 = vadd.f32 0.0, %v584
        %v586 = vpop.f32.mrf.mxu0
        %587 = vmatprep.mubr.f32.mxu0 0.0
        %588 = vmatmul.mubr.f32.gmra.mxu0 %v431
        %v589 = vpop.f32.mrf.mxu0
        %v590 = vadd.f32 0.0, %v589
        %v591 = vpop.f32.mrf.mxu0
        %592 = vdwg.mxu0
        %v593 = vld [vmem:[%s307] sm:$0xff]
        %v594 = vld [vmem:[%s307 + $0x8] sm:$0xff]
        %v595 = vld [vmem:[%s307 + $0x10] sm:$0xff]
        %v596 = vld [vmem:[%s307 + $0x18] sm:$0xff]
        %v597 = vld [vmem:[%s307 + $0x20] sm:$0xff]
        %v598 = vld [vmem:[%s307 + $0x28] sm:$0xff]
        %v599 = vld [vmem:[%s307 + $0x30] sm:$0xff]
        %v600 = vld [vmem:[%s307 + $0x38] sm:$0xff]
        %v601 = vld [vmem:[%s307 + $0x40] sm:$0xff]
        %v602 = vld [vmem:[%s307 + $0x48] sm:$0xff]
        %v603 = vld [vmem:[%s307 + $0x50] sm:$0xff]
        %v604 = vld [vmem:[%s307 + $0x58] sm:$0xff]
        %v605 = vld [vmem:[%s307 + $0x60] sm:$0xff]
        %v606 = vld [vmem:[%s307 + $0x68] sm:$0xff]
        %v607 = vld [vmem:[%s307 + $0x70] sm:$0xff]
        %v608 = vld [vmem:[%s307 + $0x78] sm:$0xff]
        %v609 = vlaneseq
        %v610 = vshrl.u32 %v609, 7
        %v611 = vsub.s32 0, %v610
        %v612 = vrot.slane %v399, %v611
        %613 = vmatprep.subr.mxu0 0.0
        %614 = vmatpush1.msra.mxu0 %v608
        %615 = vmatprep.subr.mxu0 0.0
        %616 = vmatpush1.msra.mxu0 %v607
        %617 = vmatprep.subr.mxu0 0.0
        %618 = vmatpush1.msra.mxu0 %v606
        %619 = vmatprep.subr.mxu0 0.0
        %620 = vmatpush1.msra.mxu0 %v605
        %621 = vmatprep.subr.mxu0 0.0
        %622 = vmatpush1.msra.mxu0 %v604
        %623 = vmatprep.subr.mxu0 0.0
        %624 = vmatpush1.msra.mxu0 %v603
        %625 = vmatprep.subr.mxu0 0.0
        %626 = vmatpush1.msra.mxu0 %v602
        %627 = vmatprep.subr.mxu0 0.0
        %628 = vmatpush1.msra.mxu0 %v601
        %629 = vmatprep.subr.mxu0 0.0
        %630 = vmatpush1.msra.mxu0 %v600
        %631 = vmatprep.subr.mxu0 0.0
        %632 = vmatpush1.msra.mxu0 %v599
        %633 = vmatprep.subr.mxu0 0.0
        %634 = vmatpush1.msra.mxu0 %v598
        %635 = vmatprep.subr.mxu0 0.0
        %636 = vmatpush1.msra.mxu0 %v597
        %637 = vmatprep.subr.mxu0 0.0
        %638 = vmatpush1.msra.mxu0 %v596
        %639 = vmatprep.subr.mxu0 0.0
        %640 = vmatpush1.msra.mxu0 %v595
        %641 = vmatprep.subr.mxu0 0.0
        %642 = vmatpush1.msra.mxu0 %v594
        %643 = vmatprep.subr.mxu0 0.0
        %644 = vmatpush1.msra.mxu0 %v593
        %645 = vmatprep.subr.mxu0 0.0
        %646 = vmatpush2.msra.mxu0 0.0
        %647 = vmatprep.subr.mxu0 0.0
        %648 = vmatpush2.msra.mxu0 0.0
        %649 = vmatprep.subr.mxu0 0.0
        %650 = vmatpush2.msra.mxu0 0.0
        %651 = vmatprep.subr.mxu0 0.0
        %652 = vmatpush2.msra.mxu0 0.0
        %653 = vmatprep.subr.mxu0 0.0
        %654 = vmatpush2.msra.mxu0 0.0
        %655 = vmatprep.subr.mxu0 0.0
        %656 = vmatpush2.msra.mxu0 0.0
        %657 = vmatprep.subr.mxu0 0.0
        %658 = vmatpush2.msra.mxu0 0.0
        %659 = vmatprep.subr.mxu0 0.0
        %660 = vmatpush2.msra.mxu0 0.0
        %661 = vmatprep.subr.mxu0 0.0
        %662 = vmatpush2.msra.mxu0 0.0
        %663 = vmatprep.subr.mxu0 0.0
        %664 = vmatpush2.msra.mxu0 0.0
        %665 = vmatprep.subr.mxu0 0.0
        %666 = vmatpush2.msra.mxu0 0.0
        %667 = vmatprep.subr.mxu0 0.0
        %668 = vmatpush2.msra.mxu0 0.0
        %669 = vmatprep.subr.mxu0 0.0
        %670 = vmatpush2.msra.mxu0 0.0
        %671 = vmatprep.subr.mxu0 0.0
        %672 = vmatpush2.msra.mxu0 0.0
        %673 = vmatprep.subr.mxu0 0.0
        %674 = vmatpush2.msra.mxu0 0.0
        %675 = vmatprep.subr.mxu0 0.0
        %676 = vmatpush2.msra.mxu0 0.0
        %677 = vmatprep.mubr.f32.mxu0 0.0
        %678 = vmatmul.mubr.f32.gmra.mxu0 %v515
        %v679 = vpop.f32.mrf.mxu0
        %v680 = vadd.f32 %v612, %v679
        %v681 = vpop.f32.mrf.mxu0
        %682 = vmatprep.mubr.f32.mxu0 0.0
        %683 = vmatmul.mubr.f32.gmra.mxu0 %v520
        %v684 = vpop.f32.mrf.mxu0
        %v685 = vadd.f32 %v612, %v684
        %v686 = vpop.f32.mrf.mxu0
        %687 = vmatprep.mubr.f32.mxu0 0.0
        %688 = vmatmul.mubr.f32.gmra.mxu0 %v525
        %v689 = vpop.f32.mrf.mxu0
        %v690 = vadd.f32 %v612, %v689
        %v691 = vpop.f32.mrf.mxu0
        %692 = vmatprep.mubr.f32.mxu0 0.0
        %693 = vmatmul.mubr.f32.gmra.mxu0 %v530
        %v694 = vpop.f32.mrf.mxu0
        %v695 = vadd.f32 %v612, %v694
        %v696 = vpop.f32.mrf.mxu0
        %697 = vmatprep.mubr.f32.mxu0 0.0
        %698 = vmatmul.mubr.f32.gmra.mxu0 %v535
        %v699 = vpop.f32.mrf.mxu0
        %v700 = vadd.f32 %v612, %v699
        %v701 = vpop.f32.mrf.mxu0
        %702 = vmatprep.mubr.f32.mxu0 0.0
        %703 = vmatmul.mubr.f32.gmra.mxu0 %v540
        %v704 = vpop.f32.mrf.mxu0
        %v705 = vadd.f32 %v612, %v704
        %v706 = vpop.f32.mrf.mxu0
        %707 = vmatprep.mubr.f32.mxu0 0.0
        %708 = vmatmul.mubr.f32.gmra.mxu0 %v545
        %v709 = vpop.f32.mrf.mxu0
        %v710 = vadd.f32 %v612, %v709
        %v711 = vpop.f32.mrf.mxu0
        %712 = vmatprep.mubr.f32.mxu0 0.0
        %713 = vmatmul.mubr.f32.gmra.mxu0 %v550
        %v714 = vpop.f32.mrf.mxu0
        %v715 = vadd.f32 %v612, %v714
        %v716 = vpop.f32.mrf.mxu0
        %717 = vmatprep.mubr.f32.mxu0 0.0
        %718 = vmatmul.mubr.f32.gmra.mxu0 %v555
        %v719 = vpop.f32.mrf.mxu0
        %v720 = vadd.f32 %v612, %v719
        %v721 = vpop.f32.mrf.mxu0
        %722 = vmatprep.mubr.f32.mxu0 0.0
        %723 = vmatmul.mubr.f32.gmra.mxu0 %v560
        %v724 = vpop.f32.mrf.mxu0
        %v725 = vadd.f32 %v612, %v724
        %v726 = vpop.f32.mrf.mxu0
        %727 = vmatprep.mubr.f32.mxu0 0.0
        %728 = vmatmul.mubr.f32.gmra.mxu0 %v565
        %v729 = vpop.f32.mrf.mxu0
        %v730 = vadd.f32 %v612, %v729
        %v731 = vpop.f32.mrf.mxu0
        %732 = vmatprep.mubr.f32.mxu0 0.0
        %733 = vmatmul.mubr.f32.gmra.mxu0 %v570
        %v734 = vpop.f32.mrf.mxu0
        %v735 = vadd.f32 %v612, %v734
        %v736 = vpop.f32.mrf.mxu0
        %737 = vmatprep.mubr.f32.mxu0 0.0
        %738 = vmatmul.mubr.f32.gmra.mxu0 %v575
        %v739 = vpop.f32.mrf.mxu0
        %v740 = vadd.f32 %v612, %v739
        %v741 = vpop.f32.mrf.mxu0
        %742 = vmatprep.mubr.f32.mxu0 0.0
        %743 = vmatmul.mubr.f32.gmra.mxu0 %v580
        %v744 = vpop.f32.mrf.mxu0
        %v745 = vadd.f32 %v612, %v744
        %v746 = vpop.f32.mrf.mxu0
        %747 = vmatprep.mubr.f32.mxu0 0.0
        %748 = vmatmul.mubr.f32.gmra.mxu0 %v585
        %v749 = vpop.f32.mrf.mxu0
        %v750 = vadd.f32 %v612, %v749
        %v751 = vpop.f32.mrf.mxu0
        %752 = vmatprep.mubr.f32.mxu0 0.0
        %753 = vmatmul.mubr.f32.gmra.mxu0 %v590
        %v754 = vpop.f32.mrf.mxu0
        %v755 = vadd.f32 %v612, %v754
        %v756 = vpop.f32.mrf.mxu0
        %757 = vdwg.mxu0
        %v758 = vmax.f32 %v680, 0.0
        %v759 = vmax.f32 %v685, 0.0
        %v760 = vmax.f32 %v690, 0.0
        %v761 = vmax.f32 %v695, 0.0
        %v762 = vmax.f32 %v700, 0.0
        %v763 = vmax.f32 %v705, 0.0
        %v764 = vmax.f32 %v710, 0.0
        %v765 = vmax.f32 %v715, 0.0
        %v766 = vmax.f32 %v720, 0.0
        %v767 = vmax.f32 %v725, 0.0
        %v768 = vmax.f32 %v730, 0.0
        %v769 = vmax.f32 %v735, 0.0
        %v770 = vmax.f32 %v740, 0.0
        %v771 = vmax.f32 %v745, 0.0
        %v772 = vmax.f32 %v750, 0.0
        %v773 = vmax.f32 %v755, 0.0
        %v774 = vld [vmem:[%s316] sm:$0xff]
        %v775 = vld [vmem:[%s316 + $0x8] sm:$0xff]
        %v776 = vld [vmem:[%s316 + $0x10] sm:$0xff]
        %v777 = vld [vmem:[%s316 + $0x18] sm:$0xff]
        %v778 = vld [vmem:[%s316 + $0x20] sm:$0xff]
        %v779 = vld [vmem:[%s316 + $0x28] sm:$0xff]
        %v780 = vld [vmem:[%s316 + $0x30] sm:$0xff]
        %v781 = vld [vmem:[%s316 + $0x38] sm:$0xff]
        %v782 = vld [vmem:[%s316 + $0x40] sm:$0xff]
        %v783 = vld [vmem:[%s316 + $0x48] sm:$0xff]
        %v784 = vld [vmem:[%s316 + $0x50] sm:$0xff]
        %v785 = vld [vmem:[%s316 + $0x58] sm:$0xff]
        %v786 = vld [vmem:[%s316 + $0x60] sm:$0xff]
        %v787 = vld [vmem:[%s316 + $0x68] sm:$0xff]
        %v788 = vld [vmem:[%s316 + $0x70] sm:$0xff]
        %v789 = vld [vmem:[%s316 + $0x78] sm:$0xff]
        %v790 = vlaneseq
        %v791 = vshrl.u32 %v790, 7
        %v792 = vsub.s32 1, %v791
        %v793 = vrot.slane %v399, %v792
        %794 = vmatprep.subr.mxu0 0.0
        %795 = vmatpush1.msra.mxu0 %v789
        %796 = vmatprep.subr.mxu0 0.0
        %797 = vmatpush1.msra.mxu0 %v788
        %798 = vmatprep.subr.mxu0 0.0
        %799 = vmatpush1.msra.mxu0 %v787
        %800 = vmatprep.subr.mxu0 0.0
        %801 = vmatpush1.msra.mxu0 %v786
        %802 = vmatprep.subr.mxu0 0.0
        %803 = vmatpush1.msra.mxu0 %v785
        %804 = vmatprep.subr.mxu0 0.0
        %805 = vmatpush1.msra.mxu0 %v784
        %806 = vmatprep.subr.mxu0 0.0
        %807 = vmatpush1.msra.mxu0 %v783
        %808 = vmatprep.subr.mxu0 0.0
        %809 = vmatpush1.msra.mxu0 %v782
        %810 = vmatprep.subr.mxu0 0.0
        %811 = vmatpush1.msra.mxu0 %v781
        %812 = vmatprep.subr.mxu0 0.0
        %813 = vmatpush1.msra.mxu0 %v780
        %814 = vmatprep.subr.mxu0 0.0
        %815 = vmatpush1.msra.mxu0 %v779
        %816 = vmatprep.subr.mxu0 0.0
        %817 = vmatpush1.msra.mxu0 %v778
        %818 = vmatprep.subr.mxu0 0.0
        %819 = vmatpush1.msra.mxu0 %v777
        %820 = vmatprep.subr.mxu0 0.0
        %821 = vmatpush1.msra.mxu0 %v776
        %822 = vmatprep.subr.mxu0 0.0
        %823 = vmatpush1.msra.mxu0 %v775
        %824 = vmatprep.subr.mxu0 0.0
        %825 = vmatpush1.msra.mxu0 %v774
        %826 = vmatprep.subr.mxu0 0.0
        %827 = vmatpush2.msra.mxu0 0.0
        %828 = vmatprep.subr.mxu0 0.0
        %829 = vmatpush2.msra.mxu0 0.0
        %830 = vmatprep.subr.mxu0 0.0
        %831 = vmatpush2.msra.mxu0 0.0
        %832 = vmatprep.subr.mxu0 0.0
        %833 = vmatpush2.msra.mxu0 0.0
        %834 = vmatprep.subr.mxu0 0.0
        %835 = vmatpush2.msra.mxu0 0.0
        %836 = vmatprep.subr.mxu0 0.0
        %837 = vmatpush2.msra.mxu0 0.0
        %838 = vmatprep.subr.mxu0 0.0
        %839 = vmatpush2.msra.mxu0 0.0
        %840 = vmatprep.subr.mxu0 0.0
        %841 = vmatpush2.msra.mxu0 0.0
        %842 = vmatprep.subr.mxu0 0.0
        %843 = vmatpush2.msra.mxu0 0.0
        %844 = vmatprep.subr.mxu0 0.0
        %845 = vmatpush2.msra.mxu0 0.0
        %846 = vmatprep.subr.mxu0 0.0
        %847 = vmatpush2.msra.mxu0 0.0
        %848 = vmatprep.subr.mxu0 0.0
        %849 = vmatpush2.msra.mxu0 0.0
        %850 = vmatprep.subr.mxu0 0.0
        %851 = vmatpush2.msra.mxu0 0.0
        %852 = vmatprep.subr.mxu0 0.0
        %853 = vmatpush2.msra.mxu0 0.0
        %854 = vmatprep.subr.mxu0 0.0
        %855 = vmatpush2.msra.mxu0 0.0
        %856 = vmatprep.subr.mxu0 0.0
        %857 = vmatpush2.msra.mxu0 0.0
        %858 = vmatprep.mubr.f32.mxu0 0.0
        %859 = vmatmul.mubr.f32.gmra.mxu0 %v758
        %v860 = vpop.f32.mrf.mxu0
        %v861 = vadd.f32 %v793, %v860
        %v862 = vpop.f32.mrf.mxu0
        %863 = vmatprep.mubr.f32.mxu0 0.0
        %864 = vmatmul.mubr.f32.gmra.mxu0 %v759
        %v865 = vpop.f32.mrf.mxu0
        %v866 = vadd.f32 %v793, %v865
        %v867 = vpop.f32.mrf.mxu0
        %868 = vmatprep.mubr.f32.mxu0 0.0
        %869 = vmatmul.mubr.f32.gmra.mxu0 %v760
        %v870 = vpop.f32.mrf.mxu0
        %v871 = vadd.f32 %v793, %v870
        %v872 = vpop.f32.mrf.mxu0
        %873 = vmatprep.mubr.f32.mxu0 0.0
        %874 = vmatmul.mubr.f32.gmra.mxu0 %v761
        %v875 = vpop.f32.mrf.mxu0
        %v876 = vadd.f32 %v793, %v875
        %v877 = vpop.f32.mrf.mxu0
        %878 = vmatprep.mubr.f32.mxu0 0.0
        %879 = vmatmul.mubr.f32.gmra.mxu0 %v762
        %v880 = vpop.f32.mrf.mxu0
        %v881 = vadd.f32 %v793, %v880
        %v882 = vpop.f32.mrf.mxu0
        %883 = vmatprep.mubr.f32.mxu0 0.0
        %884 = vmatmul.mubr.f32.gmra.mxu0 %v763
        %v885 = vpop.f32.mrf.mxu0
        %v886 = vadd.f32 %v793, %v885
        %v887 = vpop.f32.mrf.mxu0
        %888 = vmatprep.mubr.f32.mxu0 0.0
        %889 = vmatmul.mubr.f32.gmra.mxu0 %v764
        %v890 = vpop.f32.mrf.mxu0
        %v891 = vadd.f32 %v793, %v890
        %v892 = vpop.f32.mrf.mxu0
        %893 = vmatprep.mubr.f32.mxu0 0.0
        %894 = vmatmul.mubr.f32.gmra.mxu0 %v765
        %v895 = vpop.f32.mrf.mxu0
        %v896 = vadd.f32 %v793, %v895
        %v897 = vpop.f32.mrf.mxu0
        %898 = vmatprep.mubr.f32.mxu0 0.0
        %899 = vmatmul.mubr.f32.gmra.mxu0 %v766
        %v900 = vpop.f32.mrf.mxu0
        %v901 = vadd.f32 %v793, %v900
        %v902 = vpop.f32.mrf.mxu0
        %903 = vmatprep.mubr.f32.mxu0 0.0
        %904 = vmatmul.mubr.f32.gmra.mxu0 %v767
        %v905 = vpop.f32.mrf.mxu0
        %v906 = vadd.f32 %v793, %v905
        %v907 = vpop.f32.mrf.mxu0
        %908 = vmatprep.mubr.f32.mxu0 0.0
        %909 = vmatmul.mubr.f32.gmra.mxu0 %v768
        %v910 = vpop.f32.mrf.mxu0
        %v911 = vadd.f32 %v793, %v910
        %v912 = vpop.f32.mrf.mxu0
        %913 = vmatprep.mubr.f32.mxu0 0.0
        %914 = vmatmul.mubr.f32.gmra.mxu0 %v769
        %v915 = vpop.f32.mrf.mxu0
        %v916 = vadd.f32 %v793, %v915
        %v917 = vpop.f32.mrf.mxu0
        %918 = vmatprep.mubr.f32.mxu0 0.0
        %919 = vmatmul.mubr.f32.gmra.mxu0 %v770
        %v920 = vpop.f32.mrf.mxu0
        %v921 = vadd.f32 %v793, %v920
        %v922 = vpop.f32.mrf.mxu0
        %923 = vmatprep.mubr.f32.mxu0 0.0
        %924 = vmatmul.mubr.f32.gmra.mxu0 %v771
        %v925 = vpop.f32.mrf.mxu0
        %v926 = vadd.f32 %v793, %v925
        %v927 = vpop.f32.mrf.mxu0
        %928 = vmatprep.mubr.f32.mxu0 0.0
        %929 = vmatmul.mubr.f32.gmra.mxu0 %v772
        %v930 = vpop.f32.mrf.mxu0
        %v931 = vadd.f32 %v793, %v930
        %v932 = vpop.f32.mrf.mxu0
        %933 = vmatprep.mubr.f32.mxu0 0.0
        %934 = vmatmul.mubr.f32.gmra.mxu0 %v773
        %v935 = vpop.f32.mrf.mxu0
        %v936 = vadd.f32 %v793, %v935
        %v937 = vpop.f32.mrf.mxu0
        %938 = vdwg.mxu0
        %v939 = vmax.f32 %v861, 0.0
        %v940 = vmax.f32 %v866, 0.0
        %v941 = vmax.f32 %v871, 0.0
        %v942 = vmax.f32 %v876, 0.0
        %v943 = vmax.f32 %v881, 0.0
        %v944 = vmax.f32 %v886, 0.0
        %v945 = vmax.f32 %v891, 0.0
        %v946 = vmax.f32 %v896, 0.0
        %v947 = vmax.f32 %v901, 0.0
        %v948 = vmax.f32 %v906, 0.0
        %v949 = vmax.f32 %v911, 0.0
        %v950 = vmax.f32 %v916, 0.0
        %v951 = vmax.f32 %v921, 0.0
        %v952 = vmax.f32 %v926, 0.0
        %v953 = vmax.f32 %v931, 0.0
        %v954 = vmax.f32 %v936, 0.0
        %v955 = vlaneseq
        %v956 = vshrl.u32 %v955, 7
        %v957 = vadd.s32 %v956, 8
        %v958 = vadd.s32 %v956, 16
        %v959 = vadd.s32 %v956, 24
        %v960 = vadd.s32 %v956, 32
        %v961 = vadd.s32 %v956, 40
        %v962 = vadd.s32 %v956, 48
        %v963 = vadd.s32 %v956, 56
        %v964 = vadd.s32 %v956, 64
        %v965 = vadd.s32 %v956, 72
        %v966 = vadd.s32 %v956, 80
        %v967 = vadd.s32 %v956, 88
        %v968 = vadd.s32 %v956, 96
        %v969 = vadd.s32 %v956, 104
        %v970 = vadd.s32 %v956, 112
        %v971 = vadd.s32 %v956, 120
        %s972 = smul.u32 %s32, 128
        %v973 = vstv %s972
        %v974 = vadd.s32 %v956, %v973
        %v975 = vadd.s32 %v957, %v973
        %v976 = vadd.s32 %v958, %v973
        %v977 = vadd.s32 %v959, %v973
        %v978 = vadd.s32 %v960, %v973
        %v979 = vadd.s32 %v961, %v973
        %v980 = vadd.s32 %v962, %v973
        %v981 = vadd.s32 %v963, %v973
        %v982 = vadd.s32 %v964, %v973
        %v983 = vadd.s32 %v965, %v973
        %v984 = vadd.s32 %v966, %v973
        %v985 = vadd.s32 %v967, %v973
        %v986 = vadd.s32 %v968, %v973
        %v987 = vadd.s32 %v969, %v973
        %v988 = vadd.s32 %v970, %v973
        %v989 = vadd.s32 %v971, %v973
        %vm990 = vcmp.lt.s32.totalorder %v974, 16
        %vm991 = vcmp.lt.s32.totalorder %v975, 16
        %vm992 = vcmp.lt.s32.totalorder %v976, 16
        %vm993 = vcmp.lt.s32.totalorder %v977, 16
        %vm994 = vcmp.lt.s32.totalorder %v978, 16
        %vm995 = vcmp.lt.s32.totalorder %v979, 16
        %vm996 = vcmp.lt.s32.totalorder %v980, 16
        %vm997 = vcmp.lt.s32.totalorder %v981, 16
        %vm998 = vcmp.lt.s32.totalorder %v982, 16
        %vm999 = vcmp.lt.s32.totalorder %v983, 16
        %vm1000 = vcmp.lt.s32.totalorder %v984, 16
        %vm1001 = vcmp.lt.s32.totalorder %v985, 16
        %vm1002 = vcmp.lt.s32.totalorder %v986, 16
        %vm1003 = vcmp.lt.s32.totalorder %v987, 16
        %vm1004 = vcmp.lt.s32.totalorder %v988, 16
        %vm1005 = vcmp.lt.s32.totalorder %v989, 16
        %v1006 = vsel %vm990, %v939, 0.0
        %v1007 = vsel %vm991, %v940, 0.0
        %v1008 = vsel %vm992, %v941, 0.0
        %v1009 = vsel %vm993, %v942, 0.0
        %v1010 = vsel %vm994, %v943, 0.0
        %v1011 = vsel %vm995, %v944, 0.0
        %v1012 = vsel %vm996, %v945, 0.0
        %v1013 = vsel %vm997, %v946, 0.0
        %v1014 = vsel %vm998, %v947, 0.0
        %v1015 = vsel %vm999, %v948, 0.0
        %v1016 = vsel %vm1000, %v949, 0.0
        %v1017 = vsel %vm1001, %v950, 0.0
        %v1018 = vsel %vm1002, %v951, 0.0
        %v1019 = vsel %vm1003, %v952, 0.0
        %v1020 = vsel %vm1004, %v953, 0.0
        %v1021 = vsel %vm1005, %v954, 0.0
        %s1022 = scalar_lea.vmem [#allocation3], %s972
        %1023 = vst [vmem:[%s1022] sm:$0xff] %v1006
        %1024 = vst [vmem:[%s1022 + $0x8] sm:$0xff] %v1007
        %1025 = vst [vmem:[%s1022 + $0x10] sm:$0xff] %v1008
        %1026 = vst [vmem:[%s1022 + $0x18] sm:$0xff] %v1009
        %1027 = vst [vmem:[%s1022 + $0x20] sm:$0xff] %v1010
        %1028 = vst [vmem:[%s1022 + $0x28] sm:$0xff] %v1011
        %1029 = vst [vmem:[%s1022 + $0x30] sm:$0xff] %v1012
        %1030 = vst [vmem:[%s1022 + $0x38] sm:$0xff] %v1013
        %1031 = vst [vmem:[%s1022 + $0x40] sm:$0xff] %v1014
        %1032 = vst [vmem:[%s1022 + $0x48] sm:$0xff] %v1015
        %1033 = vst [vmem:[%s1022 + $0x50] sm:$0xff] %v1016
        %1034 = vst [vmem:[%s1022 + $0x58] sm:$0xff] %v1017
        %1035 = vst [vmem:[%s1022 + $0x60] sm:$0xff] %v1018
        %1036 = vst [vmem:[%s1022 + $0x68] sm:$0xff] %v1019
        %1037 = vst [vmem:[%s1022 + $0x70] sm:$0xff] %v1020
        %1038 = vst [vmem:[%s1022 + $0x78] sm:$0xff] %v1021
        %v1039 = vld [vmem:[#allocation4] sm:$0x1]
        %v1040 = vadd.f32 %v1006, %v1007
        %v1041 = vadd.f32 %v1040, %v1008
        %v1042 = vadd.f32 %v1041, %v1009
        %v1043 = vadd.f32 %v1042, %v1010
        %v1044 = vadd.f32 %v1043, %v1011
        %v1045 = vadd.f32 %v1044, %v1012
        %v1046 = vadd.f32 %v1045, %v1013
        %v1047 = vadd.f32 %v1046, %v1014
        %v1048 = vadd.f32 %v1047, %v1015
        %v1049 = vadd.f32 %v1048, %v1016
        %v1050 = vadd.f32 %v1049, %v1017
        %v1051 = vadd.f32 %v1050, %v1018
        %v1052 = vadd.f32 %v1051, %v1019
        %v1053 = vadd.f32 %v1052, %v1020
        %v1054 = vadd.f32 %v1053, %v1021
        %v1055 = vrot.slane %v1054, 4
        %v1056 = vadd.f32 %v1054, %v1055
        %v1057 = vrot.slane %v1056, 2
        %v1058 = vadd.f32 %v1056, %v1057
        %v1059 = vrot.slane %v1058, 1
        %v1060 = vadd.f32 %v1058, %v1059
        %v1061 = vadd.f32 %v1039, %v1060
        %1062 = vst [vmem:[#allocation4] sm:$0x1] %v1061
        %v1063 = vld [vmem:[#allocation5] sm:$0x1]
        %v1064 = vmul.f32 %v1006, %v1006
        %v1065 = vmul.f32 %v1007, %v1007
        %v1066 = vmul.f32 %v1008, %v1008
        %v1067 = vmul.f32 %v1009, %v1009
        %v1068 = vmul.f32 %v1010, %v1010
        %v1069 = vmul.f32 %v1011, %v1011
        %v1070 = vmul.f32 %v1012, %v1012
        %v1071 = vmul.f32 %v1013, %v1013
        %v1072 = vmul.f32 %v1014, %v1014
        %v1073 = vmul.f32 %v1015, %v1015
        %v1074 = vmul.f32 %v1016, %v1016
        %v1075 = vmul.f32 %v1017, %v1017
        %v1076 = vmul.f32 %v1018, %v1018
        %v1077 = vmul.f32 %v1019, %v1019
        %v1078 = vmul.f32 %v1020, %v1020
        %v1079 = vmul.f32 %v1021, %v1021
        %v1080 = vadd.f32 %v1064, %v1065
        %v1081 = vadd.f32 %v1080, %v1066
        %v1082 = vadd.f32 %v1081, %v1067
        %v1083 = vadd.f32 %v1082, %v1068
        %v1084 = vadd.f32 %v1083, %v1069
        %v1085 = vadd.f32 %v1084, %v1070
        %v1086 = vadd.f32 %v1085, %v1071
        %v1087 = vadd.f32 %v1086, %v1072
        %v1088 = vadd.f32 %v1087, %v1073
        %v1089 = vadd.f32 %v1088, %v1074
        %v1090 = vadd.f32 %v1089, %v1075
        %v1091 = vadd.f32 %v1090, %v1076
        %v1092 = vadd.f32 %v1091, %v1077
        %v1093 = vadd.f32 %v1092, %v1078
        %v1094 = vadd.f32 %v1093, %v1079
        %v1095 = vrot.slane %v1094, 4
        %v1096 = vadd.f32 %v1094, %v1095
        %v1097 = vrot.slane %v1096, 2
        %v1098 = vadd.f32 %v1096, %v1097
        %v1099 = vrot.slane %v1098, 1
        %v1100 = vadd.f32 %v1098, %v1099
        %v1101 = vadd.f32 %v1063, %v1100
        %1102 = vst [vmem:[#allocation5] sm:$0x1] %v1101
        %v1103 = vld [vmem:[#allocation6] sm:$0x3]
        %v1104 = vld [vmem:[%s370] sm:$0x3]
        %1105 = vmatprep.subr.mxu0 0.0
        %1106 = vmatpush1.msra.mxu0 %v1021
        %1107 = vmatprep.subr.mxu0 0.0
        %1108 = vmatpush1.msra.mxu0 %v1020
        %1109 = vmatprep.subr.mxu0 0.0
        %1110 = vmatpush1.msra.mxu0 %v1019
        %1111 = vmatprep.subr.mxu0 0.0
        %1112 = vmatpush1.msra.mxu0 %v1018
        %1113 = vmatprep.subr.mxu0 0.0
        %1114 = vmatpush1.msra.mxu0 %v1017
        %1115 = vmatprep.subr.mxu0 0.0
        %1116 = vmatpush1.msra.mxu0 %v1016
        %1117 = vmatprep.subr.mxu0 0.0
        %1118 = vmatpush1.msra.mxu0 %v1015
        %1119 = vmatprep.subr.mxu0 0.0
        %1120 = vmatpush1.msra.mxu0 %v1014
        %1121 = vmatprep.subr.mxu0 0.0
        %1122 = vmatpush1.msra.mxu0 %v1013
        %1123 = vmatprep.subr.mxu0 0.0
        %1124 = vmatpush1.msra.mxu0 %v1012
        %1125 = vmatprep.subr.mxu0 0.0
        %1126 = vmatpush1.msra.mxu0 %v1011
        %1127 = vmatprep.subr.mxu0 0.0
        %1128 = vmatpush1.msra.mxu0 %v1010
        %1129 = vmatprep.subr.mxu0 0.0
        %1130 = vmatpush1.msra.mxu0 %v1009
        %1131 = vmatprep.subr.mxu0 0.0
        %1132 = vmatpush1.msra.mxu0 %v1008
        %1133 = vmatprep.subr.mxu0 0.0
        %1134 = vmatpush1.msra.mxu0 %v1007
        %1135 = vmatprep.subr.mxu0 0.0
        %1136 = vmatpush1.msra.mxu0 %v1006
        %1137 = vmatprep.subr.mxu0 0.0
        %1138 = vmatpush2.msra.mxu0 0.0
        %1139 = vmatprep.subr.mxu0 0.0
        %1140 = vmatpush2.msra.mxu0 0.0
        %1141 = vmatprep.subr.mxu0 0.0
        %1142 = vmatpush2.msra.mxu0 0.0
        %1143 = vmatprep.subr.mxu0 0.0
        %1144 = vmatpush2.msra.mxu0 0.0
        %1145 = vmatprep.subr.mxu0 0.0
        %1146 = vmatpush2.msra.mxu0 0.0
        %1147 = vmatprep.subr.mxu0 0.0
        %1148 = vmatpush2.msra.mxu0 0.0
        %1149 = vmatprep.subr.mxu0 0.0
        %1150 = vmatpush2.msra.mxu0 0.0
        %1151 = vmatprep.subr.mxu0 0.0
        %1152 = vmatpush2.msra.mxu0 0.0
        %1153 = vmatprep.subr.mxu0 0.0
        %1154 = vmatpush2.msra.mxu0 0.0
        %1155 = vmatprep.subr.mxu0 0.0
        %1156 = vmatpush2.msra.mxu0 0.0
        %1157 = vmatprep.subr.mxu0 0.0
        %1158 = vmatpush2.msra.mxu0 0.0
        %1159 = vmatprep.subr.mxu0 0.0
        %1160 = vmatpush2.msra.mxu0 0.0
        %1161 = vmatprep.subr.mxu0 0.0
        %1162 = vmatpush2.msra.mxu0 0.0
        %1163 = vmatprep.subr.mxu0 0.0
        %1164 = vmatpush2.msra.mxu0 0.0
        %1165 = vmatprep.subr.mxu0 0.0
        %1166 = vmatpush2.msra.mxu0 0.0
        %1167 = vmatprep.subr.mxu0 0.0
        %1168 = vmatpush2.msra.mxu0 0.0
        %1169 = vmatprep.mubr.f32.mxu0 0.0
        %1170 = vmatmul.mubr.f32.gmra.mxu0 %v1104
        %v1171 = vpop.f32.mrf.mxu0
        %v1172 = vadd.f32 0.0, %v1171
        %v1173 = vpop.f32.mrf.mxu0
        %1174 = vdwg.mxu0
        %v1175 = vadd.f32 %v1103, %v1172
        %1176 = vst [vmem:[#allocation6] sm:$0x3] %v1175
        %v1177 = vld [vmem:[#allocation7] sm:$0x3]
        %v1178 = vld [vmem:[%s370] sm:$0x3]
        %vm1179 = vcmask 1041408
        %v1180 = vsel %vm1179, %v1178, 0.0
        %1181 = vadd.xlane.f32.xlu0 %v1180
        %v1182 = vpop.xlane.xlu0 %1181
        %v1183 = vadd.f32 %v1177, %v1182
        %vm1184 = vcmask 1024
        %1185 = vst.msk [vmem:[#allocation7] sm:$0x3] %vm1184, %v1183
        // Predicated region
        $region70: #{tpu_custom_call.1} parent=39 // pred_check
          %p1186 = pneg %p372
        $region71: #{tpu_custom_call.1} parent=39 // pred_check_branch
          %1188 = sbr.rel (%p1186) target = $region73
        $region72: #{tpu_custom_call.1} parent=39 // pred_region
          %v1189 = vld [vmem:[#allocation4] sm:$0x1]
          %v1190 = vmul.f32 %v1189, 0.0625
          %v1191 = vld [vmem:[#allocation5] sm:$0x1]
          %v1192 = vmul.f32 %v1191, 0.0625
          %v1193 = vmul.f32 %v1190, %v1190
          %v1194 = vsub.f32 %v1192, %v1193
          %v1195 = vmax.f32 %v1194, 0.0
          %v1196 = vadd.f32 %v1195, 1e-05
          %v1197 = vrsqrt.pop %v1196
          %v1200 = vunpack.c.l.s4 1966171168
          %v1201 = vunpack.c.0.s8 %v1200
          %v1202 = vlaneseq
          %v1203 = vshrl.u32 %v1202, 7
          %v1204 = vsub.s32 %v1201, %v1203
          %v1205 = vrot.slane %v399, %v1204
          %v1207 = vunpack.c.l.s4 1966171168
          %v1208 = vunpack.c.0.s8 %v1207
          %v1209 = vlaneseq
          %v1210 = vshrl.u32 %v1209, 7
          %v1211 = vsub.s32 %v1208, %v1210
          %v1212 = vrot.slane %v1205, %v1211
          %v1213 = vcombine.high %v1212, %v1212
          %v1215 = vmul.f32 %v1197, %v1213
          %v1216 = vmul.f32 %v1190, %v1215
          %v1218 = vlaneseq
          %v1219 = vshrl.u32 %v1218, 7
          %v1220 = vsub.s32 0, %v1219
          %v1221 = vrot.slane %v1216, %v1220
          %v1223 = vsub.f32 %v399, %v1221
          %v1224 = vld [vmem:[#allocation3] sm:$0xff]
          %v1225 = vld [vmem:[#allocation3 + $0x8] sm:$0xff]
          %v1226 = vld [vmem:[#allocation3 + $0x10] sm:$0xff]
          %v1227 = vld [vmem:[#allocation3 + $0x18] sm:$0xff]
          %v1228 = vld [vmem:[#allocation3 + $0x20] sm:$0xff]
          %v1229 = vld [vmem:[#allocation3 + $0x28] sm:$0xff]
          %v1230 = vld [vmem:[#allocation3 + $0x30] sm:$0xff]
          %v1231 = vld [vmem:[#allocation3 + $0x38] sm:$0xff]
          %v1232 = vld [vmem:[#allocation3 + $0x40] sm:$0xff]
          %v1233 = vld [vmem:[#allocation3 + $0x48] sm:$0xff]
          %v1234 = vld [vmem:[#allocation3 + $0x50] sm:$0xff]
          %v1235 = vld [vmem:[#allocation3 + $0x58] sm:$0xff]
          %v1236 = vld [vmem:[#allocation3 + $0x60] sm:$0xff]
          %v1237 = vld [vmem:[#allocation3 + $0x68] sm:$0xff]
          %v1238 = vld [vmem:[#allocation3 + $0x70] sm:$0xff]
          %v1239 = vld [vmem:[#allocation3 + $0x78] sm:$0xff]
          %v1241 = vlaneseq
          %v1242 = vshrl.u32 %v1241, 7
          %v1243 = vsub.s32 0, %v1242
          %v1244 = vrot.slane %v1215, %v1243
          %v1246 = vmul.f32 %v1224, %v1244
          %v1247 = vmul.f32 %v1225, %v1244
          %v1248 = vmul.f32 %v1226, %v1244
          %v1249 = vmul.f32 %v1227, %v1244
          %v1250 = vmul.f32 %v1228, %v1244
          %v1251 = vmul.f32 %v1229, %v1244
          %v1252 = vmul.f32 %v1230, %v1244
          %v1253 = vmul.f32 %v1231, %v1244
          %v1254 = vmul.f32 %v1232, %v1244
          %v1255 = vmul.f32 %v1233, %v1244
          %v1256 = vmul.f32 %v1234, %v1244
          %v1257 = vmul.f32 %v1235, %v1244
          %v1258 = vmul.f32 %v1236, %v1244
          %v1259 = vmul.f32 %v1237, %v1244
          %v1260 = vmul.f32 %v1238, %v1244
          %v1261 = vmul.f32 %v1239, %v1244
          %v1262 = vlaneseq
          %v1263 = vshrl.u32 %v1262, 7
          %v1264 = vsub.s32 3, %v1263
          %v1265 = vrot.slane %v1223, %v1264
          %v1266 = vadd.f32 %v1246, %v1265
          %v1267 = vadd.f32 %v1247, %v1265
          %v1268 = vadd.f32 %v1248, %v1265
          %v1269 = vadd.f32 %v1249, %v1265
          %v1270 = vadd.f32 %v1250, %v1265
          %v1271 = vadd.f32 %v1251, %v1265
          %v1272 = vadd.f32 %v1252, %v1265
          %v1273 = vadd.f32 %v1253, %v1265
          %v1274 = vadd.f32 %v1254, %v1265
          %v1275 = vadd.f32 %v1255, %v1265
          %v1276 = vadd.f32 %v1256, %v1265
          %v1277 = vadd.f32 %v1257, %v1265
          %v1278 = vadd.f32 %v1258, %v1265
          %v1279 = vadd.f32 %v1259, %v1265
          %v1280 = vadd.f32 %v1260, %v1265
          %v1281 = vadd.f32 %v1261, %v1265
          %1282 = vst [vmem:[#allocation2] sm:$0xff] %v1266
          %1283 = vst [vmem:[#allocation2 + $0x8] sm:$0xff] %v1267
          %1284 = vst [vmem:[#allocation2 + $0x10] sm:$0xff] %v1268
          %1285 = vst [vmem:[#allocation2 + $0x18] sm:$0xff] %v1269
          %1286 = vst [vmem:[#allocation2 + $0x20] sm:$0xff] %v1270
          %1287 = vst [vmem:[#allocation2 + $0x28] sm:$0xff] %v1271
          %1288 = vst [vmem:[#allocation2 + $0x30] sm:$0xff] %v1272
          %1289 = vst [vmem:[#allocation2 + $0x38] sm:$0xff] %v1273
          %1290 = vst [vmem:[#allocation2 + $0x40] sm:$0xff] %v1274
          %1291 = vst [vmem:[#allocation2 + $0x48] sm:$0xff] %v1275
          %1292 = vst [vmem:[#allocation2 + $0x50] sm:$0xff] %v1276
          %1293 = vst [vmem:[#allocation2 + $0x58] sm:$0xff] %v1277
          %1294 = vst [vmem:[#allocation2 + $0x60] sm:$0xff] %v1278
          %1295 = vst [vmem:[#allocation2 + $0x68] sm:$0xff] %v1279
          %1296 = vst [vmem:[#allocation2 + $0x70] sm:$0xff] %v1280
          %1297 = vst [vmem:[#allocation2 + $0x78] sm:$0xff] %v1281
          %v1298 = vld [vmem:[#allocation6] sm:$0x3]
          %v1299 = vmul.f32 %v1298, %v1244
          %v1300 = vld [vmem:[#allocation7] sm:$0x3]
          %1302 = vset.pattern.permute.xlu0 0
          %1303 = vperm.xlu0 %1302, %v1300
          %v1304 = vpop.permute.xlu0 %1303
          %v1306 = vmul.f32 %v1304, %v1265
          %v1307 = vadd.f32 %v1299, %v1306
          %1308 = vst [vmem:[%s365] sm:$0x3] %v1307
        $region73: #{tpu_custom_call.1} parent=39 // pred_fallthru
          _
        %s1309 = sand.u32 %s177, 1
        %s1310 = scalar_lea.sflag [#allocation10], %s1309
        %s1311 = sand.u32 %s177, 1
        %s1312 = smul.addr %s1311, 2
        %s1313 = scalar_lea.vmem [#allocation16], %s1312
        // Predicated region
        $region74: #{tpu_custom_call.1} parent=39 // pred_check
          %p1314 = pneg %p187
        $region75: #{tpu_custom_call.1} parent=39 // pred_check_branch
          %1316 = sbr.rel (%p1314) target = $region77
        $region76: #{tpu_custom_call.1} parent=39 // pred_region
          %s1318 = ssub.s32 32, 32
          %1319 = vsyncadd %s1310, %s1318
          %s1320 = smul.addr %s31, 32
          %s1321 = scalar_lea.hbm %s6, %s1320
          %s1323 = sshll.u32 %s1313, 4
          %s1324 = int_to_ptr.vmem [resolvable:$true] %s1323
          %1326 = dma.vmem_to_hbm [thread:$0]  %s1324, 32, %s1321, %s1310
        $region77: #{tpu_custom_call.1} parent=39 // pred_fallthru
          _
      $region40: #{tpu_custom_call.1} parent=5 // pred_fallthru
        _
      %p1327 = scmp.le.s32.totalorder 2, %s22
      // Predicated region
      $region78: #{tpu_custom_call.1} parent=5 // pred_check
        %p1328 = pneg %p1327
      $region79: #{tpu_custom_call.1} parent=5 // pred_check_branch
        %1330 = sbr.rel (%p1328) target = $region81
      $region80: #{tpu_custom_call.1} parent=5 // pred_region
        %s1331 = ssub.s32 %s22, 2
        // Predicated region
        $region82: #{tpu_custom_call.1} parent=80 // pred_check
          %p1332 = pneg %p193
        $region83: #{tpu_custom_call.1} parent=80 // pred_check_branch
          %1334 = sbr.rel (%p1332) target = $region85
        $region84: #{tpu_custom_call.1} parent=80 // pred_region
          %s1335 = sand.u32 %s178, 1
          %s1336 = scalar_lea.sflag [#allocation10], %s1335
          %s1337 = sand.u32 %s178, 1
          %s1338 = smul.addr %s1337, 2
          %s1339 = scalar_lea.vmem [#allocation16], %s1338
          %1340 = dma.done %s1336, 32
        $region85: #{tpu_custom_call.1} parent=80 // pred_fallthru
          _
      $region81: #{tpu_custom_call.1} parent=5 // pred_fallthru
        _
    $region6: #{tpu_custom_call.1} parent=1 // loop_footer
      %s26 = sadd.s32 1, %s22
    $region7: #{tpu_custom_call.1} parent=1 // loop_footer_branch
      %21 = sbr.rel target = $region3
    $region8: #{tpu_custom_call.1} parent=1 // loop_exit
      _
    %1341 = vsyncpa [#allocation9], 1
    %s1342 = scalar_lea.sflag [#allocation9], 1
    %1343 = vsyncpa %s1342, 1
    %1344 = vsyncpa [#allocation12], 1
    %s1345 = scalar_lea.sflag [#allocation12], 1
    %1346 = vsyncpa %s1345, 1
    %1347 = vsyncpa [#allocation15], 1
    %s1348 = scalar_lea.sflag [#allocation15], 1
    %1349 = vsyncpa %s1348, 1
    %1350 = vsyncpa [#allocation10], 1
    %s1351 = scalar_lea.sflag [#allocation10], 1
    %1352 = vsyncpa %s1351, 1

</llo_original>
